<compile_context>
chip_gen: v7x
topology: tpu7x:2x2x1
jax: 0.10.0
libtpu: 0.0.40
codegen_flags: <defaults>
</compile_context>

<pallas_src>
import math

import jax
import jax.numpy as jnp
from jax.experimental import pallas as pl
from jax.experimental.pallas import tpu as pltpu

_EPS = 1e-5
_NEG = -1e30  # dtype-safe large negative for the causal mask (scores are f32)


def _layer_norm_f32(v, g, b):
    """LayerNorm over the last dim, all in f32. g/b broadcast from (1, D)."""
    mu = jnp.mean(v, axis=-1, keepdims=True)
    var = jnp.mean(jnp.square(v - mu), axis=-1, keepdims=True)
    return (v - mu) * jax.lax.rsqrt(var + _EPS) * g + b


def _vmem_limit_bytes():
    """~3/4 of physical VMEM: ~96 MiB on v5e/v6e (128 MiB), ~48 MiB on v7x (64 MiB/TC)."""
    cap = 64 * 1024 * 1024
    try:
        cap = int(pltpu.get_tpu_info().vmem_capacity_bytes)
    except Exception:  # pragma: no cover - conservative fallback
        pass
    return int(cap * 3 // 4)


def _bf16_elementwise_ok():
    """bf16 VPU/EUP paths exist on v6e and newer; on v5e/v4 bf16 elementwise only adds casts."""
    try:
        kind = jax.devices()[0].device_kind.lower()
    except Exception:
        return False
    for old in ("v2", "v3", "v4", "v5"):
        if old in kind:
            return False
    return True


def _pick_batch_block(batch, requested=8):
    """Largest divisor of `batch` <= requested, keeping >=2 grid steps on the
    batch axis when possible (v7x has 2 TensorCores; the 'parallel' batch axis
    is what shards across them)."""
    bt = max(1, min(requested, batch))
    if batch >= 2:
        bt = min(bt, pl.cdiv(batch, 2))
    while batch % bt:
        bt -= 1
    return bt


def clip_text_transformer(x, lw, lnf, num_heads, batch_block=8):
    """Fused OpenCLIP text transformer: L resblocks + ln_final in one pallas_call.

    x   : (B, S, D) f32 embedded tokens (tok_emb + pos_emb).
    lw  : dict of per-layer weights stacked on a leading L axis; matmul weights
          are bf16 and pre-transposed to (in, out); small params are packed:
            small    : (L, 8, D)   f32 rows [ln1_g, ln1_b, ln2_g, ln2_b, bo, b2, 0, 0]
            big_bias : (L, 1, 7D)  f32 [bqkv (3D) | b1 (4D)]
    lnf : (8, D) f32, rows [gamma, beta, 0...] of ln_final.
    """
    B, S, D = x.shape
    L = lw["wqkv"].shape[0]
    H = num_heads
    dh = D // H
    scale = 1.0 / math.sqrt(dh)
    Bt = _pick_batch_block(B, batch_block)
    act_bf16 = _bf16_elementwise_ok()

    # Additive causal mask (0 where attending is allowed, large-negative otherwise),
    # built once on host-side JAX and passed in - loop-invariant across B and L.
    ri = jnp.arange(S, dtype=jnp.int32)[:, None]
    ci = jnp.arange(S, dtype=jnp.int32)[None, :]
    mask = jnp.where(ci <= ri, 0.0, _NEG).astype(jnp.float32)  # (S, S)

    def kernel(x_ref, mask_ref, small_ref, bigb_ref,
               wqkv_ref, wo_ref, w1_ref, w2_ref, lnf_ref, o_ref):
        l = pl.program_id(1)
        nl = pl.num_programs(1)

        # Layer 0: seed the resident activation (output block stays in VMEM
        # across the whole "arbitrary" layer axis - accumulator pattern).
        @pl.when(l == 0)
        def _():
            o_ref[...] = x_ref[...]

        xb = o_ref[...]  # (Bt, S, D) f32 residual stream

        # Unpack the packed per-layer small params (static slices, zero cost).
        small = small_ref[0]                 # (8, D) f32
        ln1_g, ln1_b = small[0:1], small[1:2]
        ln2_g, ln2_b = small[2:3], small[3:4]
        bo, b2 = small[4:5], small[5:6]
        bigb = bigb_ref[0]                   # (1, 7D) f32
        bqkv = bigb[:, :3 * D]               # (1, 3D)
        b1 = bigb[:, 3 * D:]                 # (1, 4D)

        # ---------------- attention branch ----------------
        xn = _layer_norm_f32(xb, ln1_g, ln1_b).astype(jnp.bfloat16)       # (Bt,S,D)
        # qkv = LN1(x) @ Wqkv on the flattened (Bt*S, D) activation, f32 accumulate.
        qkv = jnp.dot(xn.reshape(Bt * S, D), wqkv_ref[0],
                      preferred_element_type=jnp.float32) + bqkv           # (Bt*S,3D)
        q = (qkv[:, :D] * scale).astype(jnp.bfloat16).reshape(Bt, S, D)
        k = qkv[:, D:2 * D].astype(jnp.bfloat16).reshape(Bt, S, D)
        v = qkv[:, 2 * D:].astype(jnp.bfloat16).reshape(Bt, S, D)

        m = mask_ref[...]  # (S, S) f32 additive causal mask
        # Per-head attention, batched over the Bt prompts in this block.
        # TODO(synk): at very large H consider lax.fori_loop over heads to bound
        # live ranges; with the concatenate formulation temporaries are short-lived.
        heads = []
        for h in range(H):  # static unroll over heads (static lane slices)
            sl = slice(h * dh, (h + 1) * dh)
            s = jnp.einsum('bqd,bkd->bqk', q[:, :, sl], k[:, :, sl],
                           preferred_element_type=jnp.float32)             # (Bt,S,S)
            s = s + m
            s = s - jnp.max(s, axis=-1, keepdims=True)
            p = jnp.exp(s)
            p = p * pl.reciprocal(jnp.sum(p, axis=-1, keepdims=True), approx=True)
            oh = jnp.einsum('bqk,bkd->bqd', p.astype(jnp.bfloat16), v[:, :, sl],
                            preferred_element_type=jnp.float32)            # (Bt,S,dh)
            heads.append(oh.astype(jnp.bfloat16))
        ctx = jnp.concatenate(heads, axis=-1)                              # (Bt,S,D)
        # Single full-width out-projection (full-K MXU pass, no per-head accumulator).
        attn = jnp.dot(ctx.reshape(Bt * S, D), wo_ref[0],
                       preferred_element_type=jnp.float32) + bo            # (Bt*S,D)
        xb = xb + attn.reshape(Bt, S, D)

        # ---------------- MLP branch ----------------
        xn2 = _layer_norm_f32(xb, ln2_g, ln2_b).astype(jnp.bfloat16)
        h1 = jnp.dot(xn2.reshape(Bt * S, D), w1_ref[0],
                     preferred_element_type=jnp.float32) + b1              # (Bt*S,4D)
        if act_bf16:  # bf16 VPU/EUP path on v6e+ halves elementwise traffic
            h1 = h1.astype(jnp.bfloat16)
        # TODO(synk): OpenCLIP uses exact (erf) GELU; tanh approximation used here
        # for robust Mosaic lowering (~1e-3 difference).
        h1 = jax.nn.gelu(h1, approximate=True)
        mlp = jnp.dot(h1.astype(jnp.bfloat16), w2_ref[0],
                      preferred_element_type=jnp.float32) + b2             # (Bt*S,D)
        xb = xb + mlp.reshape(Bt, S, D)

        # Intermediate layers: keep the raw residual stream resident.
        @pl.when(l < nl - 1)
        def _():
            o_ref[...] = xb

        # Last layer: apply ln_final in the epilogue (saves a separate kernel +
        # one full B*S*D HBM round trip).
        @pl.when(l == nl - 1)
        def _():
            lf = lnf_ref[...]
            o_ref[...] = _layer_norm_f32(xb, lf[0:1], lf[1:2])

    def per_layer_spec(a):
        # (L, r, c) -> one layer's (1, r, c) tile, indexed by the layer grid axis.
        return pl.BlockSpec((1,) + a.shape[1:], lambda b, l: (l, 0, 0))

    # TODO(synk): on v7x (64 MiB VMEM/TC) at D>=1024, split the layer into
    # attn/MLP sub-steps (3rd 'arbitrary' axis) to halve resident per-step weights,
    # and mark the x input pipeline_mode=pl.Buffered(1) (only read at l==0).
    in_specs = [
        pl.BlockSpec((Bt, S, D), lambda b, l: (b, 0, 0)),   # x (constant over l)
        pl.BlockSpec((S, S), lambda b, l: (0, 0)),          # causal mask
        per_layer_spec(lw["small"]),                        # packed ln/bias params
        per_layer_spec(lw["big_bias"]),                     # packed [bqkv|b1]
        per_layer_spec(lw["wqkv"]),
        per_layer_spec(lw["wo"]),
        per_layer_spec(lw["w1"]),
        per_layer_spec(lw["w2"]),
        pl.BlockSpec((8, D), lambda b, l: (0, 0)),          # ln_final [gamma;beta]
    ]

    return pl.pallas_call(
        kernel,
        grid=(B // Bt, L),
        in_specs=in_specs,
        out_specs=pl.BlockSpec((Bt, S, D), lambda b, l: (b, 0, 0)),
        out_shape=jax.ShapeDtypeStruct((B, S, D), jnp.float32),
        compiler_params=pltpu.CompilerParams(
            dimension_semantics=("parallel", "arbitrary"),
            vmem_limit_bytes=_vmem_limit_bytes(),
        ),
    )(x, mask,
      lw["small"], lw["big_bias"], lw["wqkv"], lw["wo"], lw["w1"], lw["w2"],
      lnf)


def init_params(key, vocab, seq, width, heads, n_layers):
    """Synthetic deterministic weights. Linear weights stored pre-transposed
    (in, out) - i.e. W.T of the PyTorch (out, in) convention - in bf16; small
    per-layer params packed for fewer per-step DMA windows."""
    del heads
    std = 0.02
    D = width
    keys = jax.random.split(key, 2 + 4 * n_layers)

    def wn(k, shape):
        return (std * jax.random.normal(k, shape, jnp.float32)).astype(jnp.bfloat16)

    # Packed small params: rows [ln1_g, ln1_b, ln2_g, ln2_b, bo, b2, pad, pad].
    small = jnp.zeros((n_layers, 8, D), jnp.float32)
    small = small.at[:, 0, :].set(1.0)   # ln1 gamma
    small = small.at[:, 2, :].set(1.0)   # ln2 gamma
    big_bias = jnp.zeros((n_layers, 1, 7 * D), jnp.float32)  # [bqkv (3D) | b1 (4D)]
    lnf = jnp.zeros((8, D), jnp.float32).at[0, :].set(1.0)   # rows [gamma, beta, 0...]

    params = {
        "tok_emb": std * jax.random.normal(keys[0], (vocab, D), jnp.float32),
        "pos_emb": std * jax.random.normal(keys[1], (seq, D), jnp.float32),
        "lnf": lnf,
        "layers": {
            "small": small,
            "big_bias": big_bias,
            "wqkv": jnp.stack([wn(keys[2 + 4 * i + 0], (D, 3 * D)) for i in range(n_layers)]),
            "wo": jnp.stack([wn(keys[2 + 4 * i + 1], (D, D)) for i in range(n_layers)]),
            "w1": jnp.stack([wn(keys[2 + 4 * i + 2], (D, 4 * D)) for i in range(n_layers)]),
            "w2": jnp.stack([wn(keys[2 + 4 * i + 3], (4 * D, D)) for i in range(n_layers)]),
        },
    }
    return params


def encode_with_transformer(tokens, params, num_heads, layer="last", batch_block=8):
    """FrozenOpenCLIPEmbedder.encode_with_transformer, proj=False."""
    # Embedding gather + positional add (glue, plain JAX).
    x = params["tok_emb"][tokens] + params["pos_emb"][None, :, :]  # (B, S, D) f32

    layer_idx = 0 if layer == "last" else 1
    n_total = params["layers"]["wqkv"].shape[0]
    n_run = n_total - layer_idx
    lw = {k: v[:n_run] for k, v in params["layers"].items()}

    return clip_text_transformer(x, lw, params["lnf"], num_heads, batch_block)
    # TODO(synk): optional proj=True path (x[arange(B), tokens.argmax(-1)] @ text_projection)
    # omitted; default forward uses proj=False.


if __name__ == "__main__":
    B, S, D, H, L, VOCAB = 2, 8, 32, 4, 2, 1000  # batch, seq(max_length), width, heads, layers

    key = jax.random.PRNGKey(0)
    params = init_params(key, VOCAB, S, D, H, L)
    tok_key = jax.random.fold_in(key, 999)
    # open_clip.tokenize is a BPE tokenizer; here we feed pre-tokenized int ids directly.
    tokens = jax.random.randint(tok_key, (B, S), 1, VOCAB, dtype=jnp.int32)

    z = encode_with_transformer(tokens, params, num_heads=H, layer="last")
    z = jax.block_until_ready(z)

    assert z.shape == (B, S, D), z.shape
    assert bool(jnp.isfinite(z).all())
    print("KERNEL_OK")
</pallas_src>

<mosaic_0001>
module attributes {stable_mosaic.version = 11 : i64} {
  func.func @kernel(%arg0: i32, %arg1: i32, %arg2: memref<1x8x32xf32, #tpu.memory_space<vmem>>, %arg3: memref<8x8xf32, #tpu.memory_space<vmem>>, %arg4: memref<1x8x32xf32, #tpu.memory_space<vmem>>, %arg5: memref<1x1x224xf32, #tpu.memory_space<vmem>>, %arg6: memref<1x32x96xbf16, #tpu.memory_space<vmem>>, %arg7: memref<1x32x32xbf16, #tpu.memory_space<vmem>>, %arg8: memref<1x32x128xbf16, #tpu.memory_space<vmem>>, %arg9: memref<1x128x32xbf16, #tpu.memory_space<vmem>>, %arg10: memref<8x32xf32, #tpu.memory_space<vmem>>, %arg11: memref<1x8x32xf32, #tpu.memory_space<vmem>>) attributes {dimension_semantics = [#tpu.dimension_semantics<parallel>, #tpu.dimension_semantics<arbitrary>], iteration_bounds = array<i64: 2, 2>, scalar_prefetch = 0 : i64, scratch_operands = 0 : i64, tpu.core_type = #tpu.core_type<tc>, window_params = [{transform_indices = @transform_0, window_bounds = array<i64: 1, 8, 32>}, {pipeline_mode = #tpu.pipeline_mode<synchronous>, transform_indices = @transform_1, window_bounds = array<i64: 8, 8>}, {transform_indices = @transform_2, window_bounds = array<i64: 1, 8, 32>}, {transform_indices = @transform_3, window_bounds = array<i64: 1, 1, 224>}, {transform_indices = @transform_4, window_bounds = array<i64: 1, 32, 96>}, {transform_indices = @transform_5, window_bounds = array<i64: 1, 32, 32>}, {transform_indices = @transform_6, window_bounds = array<i64: 1, 32, 128>}, {transform_indices = @transform_7, window_bounds = array<i64: 1, 128, 32>}, {pipeline_mode = #tpu.pipeline_mode<synchronous>, transform_indices = @transform_8, window_bounds = array<i64: 8, 32>}, {transform_indices = @transform_9, window_bounds = array<i64: 1, 8, 32>}]} {
    %c0_i32 = arith.constant 0 : i32
    %0 = arith.cmpi eq, %arg1, %c0_i32 : i32
    %1 = arith.extui %0 : i1 to i32
    %c0_i32_0 = arith.constant 0 : i32
    %2 = arith.cmpi ne, %1, %c0_i32_0 : i32
    scf.if %2 {
      %c0_60 = arith.constant 0 : index
      %c0_61 = arith.constant 0 : index
      %c0_62 = arith.constant 0 : index
      %202 = vector.load %arg2[%c0_60, %c0_61, %c0_62] : memref<1x8x32xf32, #tpu.memory_space<vmem>>, vector<1x8x32xf32>
      %c0_63 = arith.constant 0 : index
      %c0_64 = arith.constant 0 : index
      %c0_65 = arith.constant 0 : index
      %203 = vector.load %arg11[%c0_63, %c0_64, %c0_65] : memref<1x8x32xf32, #tpu.memory_space<vmem>>, vector<1x8x32xf32>
      tpu.vector_store %arg11[%c0_63, %c0_64, %c0_65], %202 {strides = array<i32>} : memref<1x8x32xf32, #tpu.memory_space<vmem>>, vector<1x8x32xf32>,
    } else {
    }
    %c0 = arith.constant 0 : index
    %c0_1 = arith.constant 0 : index
    %c0_2 = arith.constant 0 : index
    %3 = vector.load %arg11[%c0, %c0_1, %c0_2] : memref<1x8x32xf32, #tpu.memory_space<vmem>>, vector<1x8x32xf32>
    %c0_3 = arith.constant 0 : index
    %c0_4 = arith.constant 0 : index
    %c0_5 = arith.constant 0 : index
    %4 = vector.load %arg4[%c0_3, %c0_4, %c0_5] : memref<1x8x32xf32, #tpu.memory_space<vmem>>, vector<1x8x32xf32>
    %5 = vector.shape_cast %4 : vector<1x8x32xf32> to vector<8x32xf32>
    %6 = vector.extract_strided_slice %5 {offsets = [0, 0], sizes = [1, 32], strides = [1, 1]} : vector<8x32xf32> to vector<1x32xf32>
    %7 = vector.extract_strided_slice %5 {offsets = [1, 0], sizes = [1, 32], strides = [1, 1]} : vector<8x32xf32> to vector<1x32xf32>
    %8 = vector.extract_strided_slice %5 {offsets = [2, 0], sizes = [1, 32], strides = [1, 1]} : vector<8x32xf32> to vector<1x32xf32>
    %9 = vector.extract_strided_slice %5 {offsets = [3, 0], sizes = [1, 32], strides = [1, 1]} : vector<8x32xf32> to vector<1x32xf32>
    %10 = vector.extract_strided_slice %5 {offsets = [4, 0], sizes = [1, 32], strides = [1, 1]} : vector<8x32xf32> to vector<1x32xf32>
    %11 = vector.extract_strided_slice %5 {offsets = [5, 0], sizes = [1, 32], strides = [1, 1]} : vector<8x32xf32> to vector<1x32xf32>
    %c0_6 = arith.constant 0 : index
    %c0_7 = arith.constant 0 : index
    %c0_8 = arith.constant 0 : index
    %12 = vector.load %arg5[%c0_6, %c0_7, %c0_8] : memref<1x1x224xf32, #tpu.memory_space<vmem>>, vector<1x1x224xf32>
    %13 = vector.shape_cast %12 : vector<1x1x224xf32> to vector<1x224xf32>
    %14 = vector.extract_strided_slice %13 {offsets = [0, 0], sizes = [1, 96], strides = [1, 1]} : vector<1x224xf32> to vector<1x96xf32>
    %15 = vector.extract_strided_slice %13 {offsets = [0, 96], sizes = [1, 128], strides = [1, 1]} : vector<1x224xf32> to vector<1x128xf32>
    %cst = arith.constant dense<0.000000e+00> : vector<1x8xf32>
    %16 = vector.multi_reduction <add>, %3, %cst [2] : vector<1x8x32xf32> to vector<1x8xf32>
    %17 = vector.shape_cast %16 : vector<1x8xf32> to vector<1x8x1xf32>
    %cst_9 = arith.constant 3.200000e+01 : f32
    %18 = vector.broadcast %cst_9 : f32 to vector<1x8x1xf32>
    %19 = arith.divf %17, %18 : vector<1x8x1xf32>
    %20 = vector.broadcast %19 : vector<1x8x1xf32> to vector<1x8x32xf32>
    %21 = arith.subf %3, %20 : vector<1x8x32xf32>
    %22 = arith.mulf %21, %21 : vector<1x8x32xf32>
    %cst_10 = arith.constant dense<0.000000e+00> : vector<1x8xf32>
    %23 = vector.multi_reduction <add>, %22, %cst_10 [2] : vector<1x8x32xf32> to vector<1x8xf32>
    %24 = vector.shape_cast %23 : vector<1x8xf32> to vector<1x8x1xf32>
    %cst_11 = arith.constant 3.200000e+01 : f32
    %25 = vector.broadcast %cst_11 : f32 to vector<1x8x1xf32>
    %26 = arith.divf %24, %25 : vector<1x8x1xf32>
    %27 = vector.broadcast %19 : vector<1x8x1xf32> to vector<1x8x32xf32>
    %28 = arith.subf %3, %27 : vector<1x8x32xf32>
    %cst_12 = arith.constant 9.99999974E-6 : f32
    %29 = vector.broadcast %cst_12 : f32 to vector<1x8x1xf32>
    %30 = arith.addf %26, %29 : vector<1x8x1xf32>
    %31 = math.rsqrt %30 : vector<1x8x1xf32>
    %32 = vector.broadcast %31 : vector<1x8x1xf32> to vector<1x8x32xf32>
    %33 = arith.mulf %28, %32 : vector<1x8x32xf32>
    %34 = vector.shape_cast %6 : vector<1x32xf32> to vector<1x1x32xf32>
    %35 = vector.broadcast %34 : vector<1x1x32xf32> to vector<1x8x32xf32>
    %36 = arith.mulf %33, %35 : vector<1x8x32xf32>
    %37 = vector.shape_cast %7 : vector<1x32xf32> to vector<1x1x32xf32>
    %38 = vector.broadcast %37 : vector<1x1x32xf32> to vector<1x8x32xf32>
    %39 = arith.addf %36, %38 : vector<1x8x32xf32>
    %40 = arith.truncf %39 : vector<1x8x32xf32> to vector<1x8x32xbf16>
    %41 = vector.shape_cast %40 : vector<1x8x32xbf16> to vector<8x32xbf16>
    %c0_13 = arith.constant 0 : index
    %c0_14 = arith.constant 0 : index
    %c0_15 = arith.constant 0 : index
    %42 = vector.load %arg6[%c0_13, %c0_14, %c0_15] : memref<1x32x96xbf16, #tpu.memory_space<vmem>>, vector<1x32x96xbf16>
    %43 = vector.shape_cast %42 : vector<1x32x96xbf16> to vector<32x96xbf16>
    %cst_16 = arith.constant dense<0.000000e+00> : vector<8x96xf32>
    %44 = tpu.matmul %41, %43, %cst_16 {dimension_numbers = #tpu.dot_dimension_numbers<[1], [0], [0], [1], [0, 0, 1, 1], [], []>} : vector<8x32xbf16>, vector<32x96xbf16>, vector<8x96xf32> -> vector<8x96xf32>
    %45 = vector.broadcast %14 : vector<1x96xf32> to vector<8x96xf32>
    %46 = arith.addf %44, %45 : vector<8x96xf32>
    %47 = vector.extract_strided_slice %46 {offsets = [0, 0], sizes = [8, 32], strides = [1, 1]} : vector<8x96xf32> to vector<8x32xf32>
    %cst_17 = arith.constant 0.353553385 : f32
    %48 = vector.broadcast %cst_17 : f32 to vector<8x32xf32>
    %49 = arith.mulf %47, %48 : vector<8x32xf32>
    %50 = arith.truncf %49 : vector<8x32xf32> to vector<8x32xbf16>
    %51 = vector.shape_cast %50 : vector<8x32xbf16> to vector<1x8x32xbf16>
    %52 = vector.extract_strided_slice %46 {offsets = [0, 32], sizes = [8, 32], strides = [1, 1]} : vector<8x96xf32> to vector<8x32xf32>
    %53 = arith.truncf %52 : vector<8x32xf32> to vector<8x32xbf16>
    %54 = vector.shape_cast %53 : vector<8x32xbf16> to vector<1x8x32xbf16>
    %55 = vector.extract_strided_slice %46 {offsets = [0, 64], sizes = [8, 32], strides = [1, 1]} : vector<8x96xf32> to vector<8x32xf32>
    %56 = arith.truncf %55 : vector<8x32xf32> to vector<8x32xbf16>
    %57 = vector.shape_cast %56 : vector<8x32xbf16> to vector<1x8x32xbf16>
    %c0_18 = arith.constant 0 : index
    %c0_19 = arith.constant 0 : index
    %58 = vector.load %arg3[%c0_18, %c0_19] : memref<8x8xf32, #tpu.memory_space<vmem>>, vector<8x8xf32>
    %59 = vector.extract_strided_slice %51 {offsets = [0, 0, 0], sizes = [1, 8, 8], strides = [1, 1, 1]} : vector<1x8x32xbf16> to vector<1x8x8xbf16>
    %60 = vector.extract_strided_slice %54 {offsets = [0, 0, 0], sizes = [1, 8, 8], strides = [1, 1, 1]} : vector<1x8x32xbf16> to vector<1x8x8xbf16>
    "tpu.trace_start"() <{level = 10 : i32, message = "bqd,bkd->bqk"}> : () -> ()
    %cst_20 = arith.constant dense<0.000000e+00> : vector<1x8x8xf32>
    %61 = tpu.matmul %59, %60, %cst_20 {dimension_numbers = #tpu.dot_dimension_numbers<[2], [2], [1], [1], [0, 0, 0, 1, 1, 1], [0], [0]>} : vector<1x8x8xbf16>, vector<1x8x8xbf16>, vector<1x8x8xf32> -> vector<1x8x8xf32>
    "tpu.trace_stop"() : () -> ()
    %62 = vector.shape_cast %58 : vector<8x8xf32> to vector<1x8x8xf32>
    %63 = arith.addf %61, %62 : vector<1x8x8xf32>
    %cst_21 = arith.constant dense<0xFF800000> : vector<1x8xf32>
    %64 = vector.multi_reduction <maximumf>, %63, %cst_21 [2] : vector<1x8x8xf32> to vector<1x8xf32>
    %65 = vector.shape_cast %64 : vector<1x8xf32> to vector<1x8x1xf32>
    %66 = vector.broadcast %65 : vector<1x8x1xf32> to vector<1x8x8xf32>
    %67 = arith.subf %63, %66 : vector<1x8x8xf32>
    %68 = math.exp %67 : vector<1x8x8xf32>
    %cst_22 = arith.constant dense<0.000000e+00> : vector<1x8xf32>
    %69 = vector.multi_reduction <add>, %68, %cst_22 [2] : vector<1x8x8xf32> to vector<1x8xf32>
    %70 = vector.shape_cast %69 : vector<1x8xf32> to vector<1x8x1xf32>
    %71 = tpu.reciprocal %70 {approx = true} : vector<1x8x1xf32> -> vector<1x8x1xf32>
    %72 = vector.broadcast %71 : vector<1x8x1xf32> to vector<1x8x8xf32>
    %73 = arith.mulf %68, %72 : vector<1x8x8xf32>
    %74 = arith.truncf %73 : vector<1x8x8xf32> to vector<1x8x8xbf16>
    %75 = vector.extract_strided_slice %57 {offsets = [0, 0, 0], sizes = [1, 8, 8], strides = [1, 1, 1]} : vector<1x8x32xbf16> to vector<1x8x8xbf16>
    "tpu.trace_start"() <{level = 10 : i32, message = "bqk,bkd->bqd"}> : () -> ()
    %cst_23 = arith.constant dense<0.000000e+00> : vector<1x8x8xf32>
    %76 = tpu.matmul %74, %75, %cst_23 {dimension_numbers = #tpu.dot_dimension_numbers<[2], [1], [1], [2], [0, 0, 0, 1, 1, 2], [0], [0]>} : vector<1x8x8xbf16>, vector<1x8x8xbf16>, vector<1x8x8xf32> -> vector<1x8x8xf32>
    "tpu.trace_stop"() : () -> ()
    %77 = arith.truncf %76 : vector<1x8x8xf32> to vector<1x8x8xbf16>
    %78 = vector.extract_strided_slice %51 {offsets = [0, 0, 8], sizes = [1, 8, 8], strides = [1, 1, 1]} : vector<1x8x32xbf16> to vector<1x8x8xbf16>
    %79 = vector.extract_strided_slice %54 {offsets = [0, 0, 8], sizes = [1, 8, 8], strides = [1, 1, 1]} : vector<1x8x32xbf16> to vector<1x8x8xbf16>
    "tpu.trace_start"() <{level = 10 : i32, message = "bqd,bkd->bqk"}> : () -> ()
    %cst_24 = arith.constant dense<0.000000e+00> : vector<1x8x8xf32>
    %80 = tpu.matmul %78, %79, %cst_24 {dimension_numbers = #tpu.dot_dimension_numbers<[2], [2], [1], [1], [0, 0, 0, 1, 1, 1], [0], [0]>} : vector<1x8x8xbf16>, vector<1x8x8xbf16>, vector<1x8x8xf32> -> vector<1x8x8xf32>
    "tpu.trace_stop"() : () -> ()
    %81 = vector.shape_cast %58 : vector<8x8xf32> to vector<1x8x8xf32>
    %82 = arith.addf %80, %81 : vector<1x8x8xf32>
    %cst_25 = arith.constant dense<0xFF800000> : vector<1x8xf32>
    %83 = vector.multi_reduction <maximumf>, %82, %cst_25 [2] : vector<1x8x8xf32> to vector<1x8xf32>
    %84 = vector.shape_cast %83 : vector<1x8xf32> to vector<1x8x1xf32>
    %85 = vector.broadcast %84 : vector<1x8x1xf32> to vector<1x8x8xf32>
    %86 = arith.subf %82, %85 : vector<1x8x8xf32>
    %87 = math.exp %86 : vector<1x8x8xf32>
    %cst_26 = arith.constant dense<0.000000e+00> : vector<1x8xf32>
    %88 = vector.multi_reduction <add>, %87, %cst_26 [2] : vector<1x8x8xf32> to vector<1x8xf32>
    %89 = vector.shape_cast %88 : vector<1x8xf32> to vector<1x8x1xf32>
    %90 = tpu.reciprocal %89 {approx = true} : vector<1x8x1xf32> -> vector<1x8x1xf32>
    %91 = vector.broadcast %90 : vector<1x8x1xf32> to vector<1x8x8xf32>
    %92 = arith.mulf %87, %91 : vector<1x8x8xf32>
    %93 = arith.truncf %92 : vector<1x8x8xf32> to vector<1x8x8xbf16>
    %94 = vector.extract_strided_slice %57 {offsets = [0, 0, 8], sizes = [1, 8, 8], strides = [1, 1, 1]} : vector<1x8x32xbf16> to vector<1x8x8xbf16>
    "tpu.trace_start"() <{level = 10 : i32, message = "bqk,bkd->bqd"}> : () -> ()
    %cst_27 = arith.constant dense<0.000000e+00> : vector<1x8x8xf32>
    %95 = tpu.matmul %93, %94, %cst_27 {dimension_numbers = #tpu.dot_dimension_numbers<[2], [1], [1], [2], [0, 0, 0, 1, 1, 2], [0], [0]>} : vector<1x8x8xbf16>, vector<1x8x8xbf16>, vector<1x8x8xf32> -> vector<1x8x8xf32>
    "tpu.trace_stop"() : () -> ()
    %96 = arith.truncf %95 : vector<1x8x8xf32> to vector<1x8x8xbf16>
    %97 = vector.extract_strided_slice %51 {offsets = [0, 0, 16], sizes = [1, 8, 8], strides = [1, 1, 1]} : vector<1x8x32xbf16> to vector<1x8x8xbf16>
    %98 = vector.extract_strided_slice %54 {offsets = [0, 0, 16], sizes = [1, 8, 8], strides = [1, 1, 1]} : vector<1x8x32xbf16> to vector<1x8x8xbf16>
    "tpu.trace_start"() <{level = 10 : i32, message = "bqd,bkd->bqk"}> : () -> ()
    %cst_28 = arith.constant dense<0.000000e+00> : vector<1x8x8xf32>
    %99 = tpu.matmul %97, %98, %cst_28 {dimension_numbers = #tpu.dot_dimension_numbers<[2], [2], [1], [1], [0, 0, 0, 1, 1, 1], [0], [0]>} : vector<1x8x8xbf16>, vector<1x8x8xbf16>, vector<1x8x8xf32> -> vector<1x8x8xf32>
    "tpu.trace_stop"() : () -> ()
    %100 = vector.shape_cast %58 : vector<8x8xf32> to vector<1x8x8xf32>
    %101 = arith.addf %99, %100 : vector<1x8x8xf32>
    %cst_29 = arith.constant dense<0xFF800000> : vector<1x8xf32>
    %102 = vector.multi_reduction <maximumf>, %101, %cst_29 [2] : vector<1x8x8xf32> to vector<1x8xf32>
    %103 = vector.shape_cast %102 : vector<1x8xf32> to vector<1x8x1xf32>
    %104 = vector.broadcast %103 : vector<1x8x1xf32> to vector<1x8x8xf32>
    %105 = arith.subf %101, %104 : vector<1x8x8xf32>
    %106 = math.exp %105 : vector<1x8x8xf32>
    %cst_30 = arith.constant dense<0.000000e+00> : vector<1x8xf32>
    %107 = vector.multi_reduction <add>, %106, %cst_30 [2] : vector<1x8x8xf32> to vector<1x8xf32>
    %108 = vector.shape_cast %107 : vector<1x8xf32> to vector<1x8x1xf32>
    %109 = tpu.reciprocal %108 {approx = true} : vector<1x8x1xf32> -> vector<1x8x1xf32>
    %110 = vector.broadcast %109 : vector<1x8x1xf32> to vector<1x8x8xf32>
    %111 = arith.mulf %106, %110 : vector<1x8x8xf32>
    %112 = arith.truncf %111 : vector<1x8x8xf32> to vector<1x8x8xbf16>
    %113 = vector.extract_strided_slice %57 {offsets = [0, 0, 16], sizes = [1, 8, 8], strides = [1, 1, 1]} : vector<1x8x32xbf16> to vector<1x8x8xbf16>
    "tpu.trace_start"() <{level = 10 : i32, message = "bqk,bkd->bqd"}> : () -> ()
    %cst_31 = arith.constant dense<0.000000e+00> : vector<1x8x8xf32>
    %114 = tpu.matmul %112, %113, %cst_31 {dimension_numbers = #tpu.dot_dimension_numbers<[2], [1], [1], [2], [0, 0, 0, 1, 1, 2], [0], [0]>} : vector<1x8x8xbf16>, vector<1x8x8xbf16>, vector<1x8x8xf32> -> vector<1x8x8xf32>
    "tpu.trace_stop"() : () -> ()
    %115 = arith.truncf %114 : vector<1x8x8xf32> to vector<1x8x8xbf16>
    %116 = vector.extract_strided_slice %51 {offsets = [0, 0, 24], sizes = [1, 8, 8], strides = [1, 1, 1]} : vector<1x8x32xbf16> to vector<1x8x8xbf16>
    %117 = vector.extract_strided_slice %54 {offsets = [0, 0, 24], sizes = [1, 8, 8], strides = [1, 1, 1]} : vector<1x8x32xbf16> to vector<1x8x8xbf16>
    "tpu.trace_start"() <{level = 10 : i32, message = "bqd,bkd->bqk"}> : () -> ()
    %cst_32 = arith.constant dense<0.000000e+00> : vector<1x8x8xf32>
    %118 = tpu.matmul %116, %117, %cst_32 {dimension_numbers = #tpu.dot_dimension_numbers<[2], [2], [1], [1], [0, 0, 0, 1, 1, 1], [0], [0]>} : vector<1x8x8xbf16>, vector<1x8x8xbf16>, vector<1x8x8xf32> -> vector<1x8x8xf32>
    "tpu.trace_stop"() : () -> ()
    %119 = vector.shape_cast %58 : vector<8x8xf32> to vector<1x8x8xf32>
    %120 = arith.addf %118, %119 : vector<1x8x8xf32>
    %cst_33 = arith.constant dense<0xFF800000> : vector<1x8xf32>
    %121 = vector.multi_reduction <maximumf>, %120, %cst_33 [2] : vector<1x8x8xf32> to vector<1x8xf32>
    %122 = vector.shape_cast %121 : vector<1x8xf32> to vector<1x8x1xf32>
    %123 = vector.broadcast %122 : vector<1x8x1xf32> to vector<1x8x8xf32>
    %124 = arith.subf %120, %123 : vector<1x8x8xf32>
    %125 = math.exp %124 : vector<1x8x8xf32>
    %cst_34 = arith.constant dense<0.000000e+00> : vector<1x8xf32>
    %126 = vector.multi_reduction <add>, %125, %cst_34 [2] : vector<1x8x8xf32> to vector<1x8xf32>
    %127 = vector.shape_cast %126 : vector<1x8xf32> to vector<1x8x1xf32>
    %128 = tpu.reciprocal %127 {approx = true} : vector<1x8x1xf32> -> vector<1x8x1xf32>
    %129 = vector.broadcast %128 : vector<1x8x1xf32> to vector<1x8x8xf32>
    %130 = arith.mulf %125, %129 : vector<1x8x8xf32>
    %131 = arith.truncf %130 : vector<1x8x8xf32> to vector<1x8x8xbf16>
    %132 = vector.extract_strided_slice %57 {offsets = [0, 0, 24], sizes = [1, 8, 8], strides = [1, 1, 1]} : vector<1x8x32xbf16> to vector<1x8x8xbf16>
    "tpu.trace_start"() <{level = 10 : i32, message = "bqk,bkd->bqd"}> : () -> ()
    %cst_35 = arith.constant dense<0.000000e+00> : vector<1x8x8xf32>
    %133 = tpu.matmul %131, %132, %cst_35 {dimension_numbers = #tpu.dot_dimension_numbers<[2], [1], [1], [2], [0, 0, 0, 1, 1, 2], [0], [0]>} : vector<1x8x8xbf16>, vector<1x8x8xbf16>, vector<1x8x8xf32> -> vector<1x8x8xf32>
    "tpu.trace_stop"() : () -> ()
    %134 = arith.truncf %133 : vector<1x8x8xf32> to vector<1x8x8xbf16>
    %135 = tpu.concatenate %77, %96, %115, %134 in 2 : vector<1x8x8xbf16>, vector<1x8x8xbf16>, vector<1x8x8xbf16>, vector<1x8x8xbf16> -> vector<1x8x32xbf16>
    %136 = vector.shape_cast %135 : vector<1x8x32xbf16> to vector<8x32xbf16>
    %c0_36 = arith.constant 0 : index
    %c0_37 = arith.constant 0 : index
    %c0_38 = arith.constant 0 : index
    %137 = vector.load %arg7[%c0_36, %c0_37, %c0_38] : memref<1x32x32xbf16, #tpu.memory_space<vmem>>, vector<1x32x32xbf16>
    %138 = vector.shape_cast %137 : vector<1x32x32xbf16> to vector<32x32xbf16>
    %cst_39 = arith.constant dense<0.000000e+00> : vector<8x32xf32>
    %139 = tpu.matmul %136, %138, %cst_39 {dimension_numbers = #tpu.dot_dimension_numbers<[1], [0], [0], [1], [0, 0, 1, 1], [], []>} : vector<8x32xbf16>, vector<32x32xbf16>, vector<8x32xf32> -> vector<8x32xf32>
    %140 = vector.broadcast %10 : vector<1x32xf32> to vector<8x32xf32>
    %141 = arith.addf %139, %140 : vector<8x32xf32>
    %142 = vector.shape_cast %141 : vector<8x32xf32> to vector<1x8x32xf32>
    %143 = arith.addf %3, %142 : vector<1x8x32xf32>
    %cst_40 = arith.constant dense<0.000000e+00> : vector<1x8xf32>
    %144 = vector.multi_reduction <add>, %143, %cst_40 [2] : vector<1x8x32xf32> to vector<1x8xf32>
    %145 = vector.shape_cast %144 : vector<1x8xf32> to vector<1x8x1xf32>
    %cst_41 = arith.constant 3.200000e+01 : f32
    %146 = vector.broadcast %cst_41 : f32 to vector<1x8x1xf32>
    %147 = arith.divf %145, %146 : vector<1x8x1xf32>
    %148 = vector.broadcast %147 : vector<1x8x1xf32> to vector<1x8x32xf32>
    %149 = arith.subf %143, %148 : vector<1x8x32xf32>
    %150 = arith.mulf %149, %149 : vector<1x8x32xf32>
    %cst_42 = arith.constant dense<0.000000e+00> : vector<1x8xf32>
    %151 = vector.multi_reduction <add>, %150, %cst_42 [2] : vector<1x8x32xf32> to vector<1x8xf32>
    %152 = vector.shape_cast %151 : vector<1x8xf32> to vector<1x8x1xf32>
    %cst_43 = arith.constant 3.200000e+01 : f32
    %153 = vector.broadcast %cst_43 : f32 to vector<1x8x1xf32>
    %154 = arith.divf %152, %153 : vector<1x8x1xf32>
    %155 = vector.broadcast %147 : vector<1x8x1xf32> to vector<1x8x32xf32>
    %156 = arith.subf %143, %155 : vector<1x8x32xf32>
    %cst_44 = arith.constant 9.99999974E-6 : f32
    %157 = vector.broadcast %cst_44 : f32 to vector<1x8x1xf32>
    %158 = arith.addf %154, %157 : vector<1x8x1xf32>
    %159 = math.rsqrt %158 : vector<1x8x1xf32>
    %160 = vector.broadcast %159 : vector<1x8x1xf32> to vector<1x8x32xf32>
    %161 = arith.mulf %156, %160 : vector<1x8x32xf32>
    %162 = vector.shape_cast %8 : vector<1x32xf32> to vector<1x1x32xf32>
    %163 = vector.broadcast %162 : vector<1x1x32xf32> to vector<1x8x32xf32>
    %164 = arith.mulf %161, %163 : vector<1x8x32xf32>
    %165 = vector.shape_cast %9 : vector<1x32xf32> to vector<1x1x32xf32>
    %166 = vector.broadcast %165 : vector<1x1x32xf32> to vector<1x8x32xf32>
    %167 = arith.addf %164, %166 : vector<1x8x32xf32>
    %168 = arith.truncf %167 : vector<1x8x32xf32> to vector<1x8x32xbf16>
    %169 = vector.shape_cast %168 : vector<1x8x32xbf16> to vector<8x32xbf16>
    %c0_45 = arith.constant 0 : index
    %c0_46 = arith.constant 0 : index
    %c0_47 = arith.constant 0 : index
    %170 = vector.load %arg8[%c0_45, %c0_46, %c0_47] : memref<1x32x128xbf16, #tpu.memory_space<vmem>>, vector<1x32x128xbf16>
    %171 = vector.shape_cast %170 : vector<1x32x128xbf16> to vector<32x128xbf16>
    %cst_48 = arith.constant dense<0.000000e+00> : vector<8x128xf32>
    %172 = tpu.matmul %169, %171, %cst_48 {dimension_numbers = #tpu.dot_dimension_numbers<[1], [0], [0], [1], [0, 0, 1, 1], [], []>} : vector<8x32xbf16>, vector<32x128xbf16>, vector<8x128xf32> -> vector<8x128xf32>
    %173 = vector.broadcast %15 : vector<1x128xf32> to vector<8x128xf32>
    %174 = arith.addf %172, %173 : vector<8x128xf32>
    %175 = arith.truncf %174 : vector<8x128xf32> to vector<8x128xbf16>
    %176 = arith.mulf %175, %175 : vector<8x128xbf16>
    %177 = arith.mulf %175, %176 : vector<8x128xbf16>
    %cst_49 = arith.constant 4.467770e-02 : bf16
    %178 = vector.broadcast %cst_49 : bf16 to vector<8x128xbf16>
    %179 = arith.mulf %178, %177 : vector<8x128xbf16>
    %180 = arith.addf %175, %179 : vector<8x128xbf16>
    %cst_50 = arith.constant 7.968750e-01 : bf16
    %181 = vector.broadcast %cst_50 : bf16 to vector<8x128xbf16>
    %182 = arith.mulf %181, %180 : vector<8x128xbf16>
    %183 = math.tanh %182 : vector<8x128xbf16>
    %cst_51 = arith.constant 1.000000e+00 : bf16
    %184 = vector.broadcast %cst_51 : bf16 to vector<8x128xbf16>
    %185 = arith.addf %184, %183 : vector<8x128xbf16>
    %cst_52 = arith.constant 5.000000e-01 : bf16
    %186 = vector.broadcast %cst_52 : bf16 to vector<8x128xbf16>
    %187 = arith.mulf %186, %185 : vector<8x128xbf16>
    %188 = arith.mulf %175, %187 : vector<8x128xbf16>
    %c0_53 = arith.constant 0 : index
    %c0_54 = arith.constant 0 : index
    %c0_55 = arith.constant 0 : index
    %189 = vector.load %arg9[%c0_53, %c0_54, %c0_55] : memref<1x128x32xbf16, #tpu.memory_space<vmem>>, vector<1x128x32xbf16>
    %190 = vector.shape_cast %189 : vector<1x128x32xbf16> to vector<128x32xbf16>
    %cst_56 = arith.constant dense<0.000000e+00> : vector<8x32xf32>
    %191 = tpu.matmul %188, %190, %cst_56 {dimension_numbers = #tpu.dot_dimension_numbers<[1], [0], [0], [1], [0, 0, 1, 1], [], []>} : vector<8x128xbf16>, vector<128x32xbf16>, vector<8x32xf32> -> vector<8x32xf32>
    %192 = vector.broadcast %11 : vector<1x32xf32> to vector<8x32xf32>
    %193 = arith.addf %191, %192 : vector<8x32xf32>
    %194 = vector.shape_cast %193 : vector<8x32xf32> to vector<1x8x32xf32>
    %195 = arith.addf %143, %194 : vector<1x8x32xf32>
    %c1_i32 = arith.constant 1 : i32
    %196 = arith.cmpi slt, %arg1, %c1_i32 : i32
    %197 = arith.extui %196 : i1 to i32
    %c0_i32_57 = arith.constant 0 : i32
    %198 = arith.cmpi ne, %197, %c0_i32_57 : i32
    scf.if %198 {
      %c0_60 = arith.constant 0 : index
      %c0_61 = arith.constant 0 : index
      %c0_62 = arith.constant 0 : index
      %202 = vector.load %arg11[%c0_60, %c0_61, %c0_62] : memref<1x8x32xf32, #tpu.memory_space<vmem>>, vector<1x8x32xf32>
      tpu.vector_store %arg11[%c0_60, %c0_61, %c0_62], %195 {strides = array<i32>} : memref<1x8x32xf32, #tpu.memory_space<vmem>>, vector<1x8x32xf32>,
    } else {
    }
    %c1_i32_58 = arith.constant 1 : i32
    %199 = arith.cmpi eq, %arg1, %c1_i32_58 : i32
    %200 = arith.extui %199 : i1 to i32
    %c0_i32_59 = arith.constant 0 : i32
    %201 = arith.cmpi ne, %200, %c0_i32_59 : i32
    scf.if %201 {
      %c0_60 = arith.constant 0 : index
      %c0_61 = arith.constant 0 : index
      %202 = vector.load %arg10[%c0_60, %c0_61] : memref<8x32xf32, #tpu.memory_space<vmem>>, vector<8x32xf32>
      %203 = vector.extract_strided_slice %202 {offsets = [0, 0], sizes = [1, 32], strides = [1, 1]} : vector<8x32xf32> to vector<1x32xf32>
      %204 = vector.extract_strided_slice %202 {offsets = [1, 0], sizes = [1, 32], strides = [1, 1]} : vector<8x32xf32> to vector<1x32xf32>
      %cst_62 = arith.constant dense<0.000000e+00> : vector<1x8xf32>
      %205 = vector.multi_reduction <add>, %195, %cst_62 [2] : vector<1x8x32xf32> to vector<1x8xf32>
      %206 = vector.shape_cast %205 : vector<1x8xf32> to vector<1x8x1xf32>
      %cst_63 = arith.constant 3.200000e+01 : f32
      %207 = vector.broadcast %cst_63 : f32 to vector<1x8x1xf32>
      %208 = arith.divf %206, %207 : vector<1x8x1xf32>
      %209 = vector.broadcast %208 : vector<1x8x1xf32> to vector<1x8x32xf32>
      %210 = arith.subf %195, %209 : vector<1x8x32xf32>
      %211 = arith.mulf %210, %210 : vector<1x8x32xf32>
      %cst_64 = arith.constant dense<0.000000e+00> : vector<1x8xf32>
      %212 = vector.multi_reduction <add>, %211, %cst_64 [2] : vector<1x8x32xf32> to vector<1x8xf32>
      %213 = vector.shape_cast %212 : vector<1x8xf32> to vector<1x8x1xf32>
      %cst_65 = arith.constant 3.200000e+01 : f32
      %214 = vector.broadcast %cst_65 : f32 to vector<1x8x1xf32>
      %215 = arith.divf %213, %214 : vector<1x8x1xf32>
      %216 = vector.broadcast %208 : vector<1x8x1xf32> to vector<1x8x32xf32>
      %217 = arith.subf %195, %216 : vector<1x8x32xf32>
      %cst_66 = arith.constant 9.99999974E-6 : f32
      %218 = vector.broadcast %cst_66 : f32 to vector<1x8x1xf32>
      %219 = arith.addf %215, %218 : vector<1x8x1xf32>
      %220 = math.rsqrt %219 : vector<1x8x1xf32>
      %221 = vector.broadcast %220 : vector<1x8x1xf32> to vector<1x8x32xf32>
      %222 = arith.mulf %217, %221 : vector<1x8x32xf32>
      %223 = vector.shape_cast %203 : vector<1x32xf32> to vector<1x1x32xf32>
      %224 = vector.broadcast %223 : vector<1x1x32xf32> to vector<1x8x32xf32>
      %225 = arith.mulf %222, %224 : vector<1x8x32xf32>
      %226 = vector.shape_cast %204 : vector<1x32xf32> to vector<1x1x32xf32>
      %227 = vector.broadcast %226 : vector<1x1x32xf32> to vector<1x8x32xf32>
      %228 = arith.addf %225, %227 : vector<1x8x32xf32>
      %c0_67 = arith.constant 0 : index
      %c0_68 = arith.constant 0 : index
      %c0_69 = arith.constant 0 : index
      %229 = vector.load %arg11[%c0_67, %c0_68, %c0_69] : memref<1x8x32xf32, #tpu.memory_space<vmem>>, vector<1x8x32xf32>
      tpu.vector_store %arg11[%c0_67, %c0_68, %c0_69], %228 {strides = array<i32>} : memref<1x8x32xf32, #tpu.memory_space<vmem>>, vector<1x8x32xf32>,
    } else {
    }
    return
  }
  func.func @transform_0(%arg0: i32, %arg1: i32) -> (i32, i32, i32) {
    %c0_i32 = arith.constant 0 : i32
    %c0_i32_0 = arith.constant 0 : i32
    %c0_i32_1 = arith.constant 0 : i32
    return %arg0, %c0_i32, %c0_i32_0 : i32, i32, i32
  }
  func.func @transform_1(%arg0: i32, %arg1: i32) -> (i32, i32) {
    %c0_i32 = arith.constant 0 : i32
    %c0_i32_0 = arith.constant 0 : i32
    %c0_i32_1 = arith.constant 0 : i32
    return %c0_i32, %c0_i32_0 : i32, i32
  }
  func.func @transform_2(%arg0: i32, %arg1: i32) -> (i32, i32, i32) {
    %c0_i32 = arith.constant 0 : i32
    %c0_i32_0 = arith.constant 0 : i32
    %c0_i32_1 = arith.constant 0 : i32
    return %arg1, %c0_i32, %c0_i32_0 : i32, i32, i32
  }
  func.func @transform_3(%arg0: i32, %arg1: i32) -> (i32, i32, i32) {
    %c0_i32 = arith.constant 0 : i32
    %c0_i32_0 = arith.constant 0 : i32
    %c0_i32_1 = arith.constant 0 : i32
    return %arg1, %c0_i32, %c0_i32_0 : i32, i32, i32
  }
  func.func @transform_4(%arg0: i32, %arg1: i32) -> (i32, i32, i32) {
    %c0_i32 = arith.constant 0 : i32
    %c0_i32_0 = arith.constant 0 : i32
    %c0_i32_1 = arith.constant 0 : i32
    return %arg1, %c0_i32, %c0_i32_0 : i32, i32, i32
  }
  func.func @transform_5(%arg0: i32, %arg1: i32) -> (i32, i32, i32) {
    %c0_i32 = arith.constant 0 : i32
    %c0_i32_0 = arith.constant 0 : i32
    %c0_i32_1 = arith.constant 0 : i32
    return %arg1, %c0_i32, %c0_i32_0 : i32, i32, i32
  }
  func.func @transform_6(%arg0: i32, %arg1: i32) -> (i32, i32, i32) {
    %c0_i32 = arith.constant 0 : i32
    %c0_i32_0 = arith.constant 0 : i32
    %c0_i32_1 = arith.constant 0 : i32
    return %arg1, %c0_i32, %c0_i32_0 : i32, i32, i32
  }
  func.func @transform_7(%arg0: i32, %arg1: i32) -> (i32, i32, i32) {
    %c0_i32 = arith.constant 0 : i32
    %c0_i32_0 = arith.constant 0 : i32
    %c0_i32_1 = arith.constant 0 : i32
    return %arg1, %c0_i32, %c0_i32_0 : i32, i32, i32
  }
  func.func @transform_8(%arg0: i32, %arg1: i32) -> (i32, i32) {
    %c0_i32 = arith.constant 0 : i32
    %c0_i32_0 = arith.constant 0 : i32
    %c0_i32_1 = arith.constant 0 : i32
    return %c0_i32, %c0_i32_0 : i32, i32
  }
  func.func @transform_9(%arg0: i32, %arg1: i32) -> (i32, i32, i32) {
    %c0_i32 = arith.constant 0 : i32
    %c0_i32_0 = arith.constant 0 : i32
    %c0_i32_1 = arith.constant 0 : i32
    return %arg0, %c0_i32, %c0_i32_0 : i32, i32, i32
  }
}

</mosaic_0001>

<llo_original>
// kernel: tpu_custom_call.1
$region0: #{tpu_custom_call.1}
  #allocation0 [shape = 'u32[]', space=smem, size = 0x4, offset = 0x4, fixed_abs, tag = 'smem constant byte address 0x4 - core index']
  #allocation1 [shape = 'u32[144,128]{1,0:T(1,128)}', space=vmem, size = 0x12000, scoped, tag = 'internal scratch']
  %s0 = inlined_call_operand.vmem [shape: f32[2,8,32], index: 0, kind: input, shape index: {}]
  %s1 = inlined_call_operand.vmem [shape: f32[8,8], index: 1, kind: input, shape index: {}]
  %s2 = inlined_call_operand.vmem [shape: f32[2,8,32], index: 2, kind: input, shape index: {}]
  %s3 = inlined_call_operand.vmem [shape: f32[2,1,224], index: 3, kind: input, shape index: {}]
  %s4 = inlined_call_operand.vmem [shape: bf16[2,32,96], index: 4, kind: input, shape index: {}]
  %s5 = inlined_call_operand.vmem [shape: bf16[2,32,32], index: 5, kind: input, shape index: {}]
  %s6 = inlined_call_operand.vmem [shape: bf16[2,32,128], index: 6, kind: input, shape index: {}]
  %s7 = inlined_call_operand.vmem [shape: bf16[2,128,32], index: 7, kind: input, shape index: {}]
  %s8 = inlined_call_operand.vmem [shape: f32[8,32], index: 8, kind: input, shape index: {}]
  %s9 = inlined_call_operand.hbm [shape: f32[2,8,32], index: 9, kind: output, shape index: {}]
  %s10 = sld [smem:[#allocation0]]
  $region81: #{tpu_custom_call.1} parent=0
    _
  %s12 = ssub.s32 1, %s10
  %s13 = scalar_select 0, %s12, %s10
  $region1: #{tpu_custom_call.1} parent=0
    #allocation2 [shape = 'u8[8192]{0}', space=vmem, size = 0x2000, scoped, tag = 'output window, operand 0']
    #allocation3 [shape = 's32[2]{0}', space=sflag, size = 0x8, scoped, tag = 'scoped memory for tpu_custom_call.1']
    %14 = vsyncpa [#allocation3], 0
    %s15 = scalar_lea.sflag [#allocation3], 1
    %16 = vsyncpa %s15, 0
    loop: start=0, step=1, limit=6
    $region2: #{tpu_custom_call.1} parent=1 // loop_pre_header
      _
    $region3: #{tpu_custom_call.1} parent=1 // loop_header
      %s18 = sphi 0, %s22
      %p19 = scmp.ge.s32.totalorder %s18, 6
      %s25 = sphi 0, %s37
      %s26 = sphi 0, %s33
      %s27 = sphi 0, %s25
      %s28 = sphi 0, %s26
      %s29 = sphi 0, %s27
      %s30 = sphi 0, %s28
      %s40 = sphi 0, %s42
      %s43 = sphi 0, %s40
      %s44 = sphi 0, %s43
      %s60 = sphi 0, %s44
      %s64 = sphi 0, %s64
      %s66 = sphi 0, %s64
      %s67 = sphi 0, %s66
      %s81 = sphi 0, %s67
      %s87 = sphi 0, %s89
      %s90 = sphi 0, %s87
      %s91 = sphi 0, %s90
      %s107 = sphi 0, %s91
      %s113 = sphi 0, %s115
      %s116 = sphi 0, %s113
      %s117 = sphi 0, %s116
      %s133 = sphi 0, %s117
      %s139 = sphi 0, %s141
      %s142 = sphi 0, %s139
      %s143 = sphi 0, %s142
      %s159 = sphi 0, %s143
      %s165 = sphi 0, %s167
      %s168 = sphi 0, %s165
      %s169 = sphi 0, %s168
      %s185 = sphi 0, %s169
      %s191 = sphi 0, %s193
      %s194 = sphi 0, %s191
      %s195 = sphi 0, %s194
      %s211 = sphi 0, %s195
      %s217 = sphi 0, %s219
      %s220 = sphi 0, %s217
      %s221 = sphi 0, %s220
      %s237 = sphi 0, %s221
      %s241 = sphi 0, %s241
      %s243 = sphi 0, %s241
      %s244 = sphi 0, %s243
      %s258 = sphi 0, %s244
      %s264 = sphi 0, %s266
      %s267 = sphi 0, %s264
      %s268 = sphi 0, %s267
      %s284 = sphi 0, %s268
    $region4: #{tpu_custom_call.1} parent=1 // loop_header_branch
      %21 = sbr.rel (%p19) target = $region8
    $region5: #{tpu_custom_call.1} parent=1 // loop_body
      %s23 = ssub.s32 %s18, 1
      %s24 = ssub.s32 %s18, 2
      %s31 = sadd.s32 1, %s26
      %p32 = scmp.ge.s32.totalorder %s31, 2
      %s33 = scalar_select %p32, 0, %s31
      %s34 = sadd.s32 1, %s25
      %s35 = scalar_select %p32, %s34, %s25
      %p36 = scmp.ge.s32.totalorder %s35, 2
      %s37 = scalar_select %p36, 0, %s35
      %s38 = ssub.s32 %s25, %s37
      %p39 = scmp.eq.s32.totalorder %s38, 0
      %s41 = sadd.s32 %s40, 1
      %s42 = scalar_select %p39, %s40, %s41
      %p45 = pneg %p39
      %p46 = scmp.eq.s32.totalorder %s18, 3
      %p47 = por %p45, %p46
      %p48 = scmp.ne.s32.totalorder %s40, %s43
      %p49 = scmp.eq.s32.totalorder %s18, 0
      %p50 = por %p48, %p49
      %p51 = scmp.ne.s32.totalorder %s40, %s43
      %p52 = scmp.eq.s32.totalorder %s23, 3
      %p53 = por %p51, %p52
      %p54 = scmp.ne.s32.totalorder %s43, %s44
      %p55 = scmp.eq.s32.totalorder %s23, 0
      %p56 = por %p54, %p55
      %p57 = scmp.ne.s32.totalorder %s43, %s44
      %p58 = scmp.eq.s32.totalorder %s24, 3
      %p59 = por %p57, %p58
      %p61 = scmp.ne.s32.totalorder %s44, %s60
      %p62 = scmp.eq.s32.totalorder %s24, 0
      %p63 = por %p61, %p62
      %s65 = sadd.s32 %s64, 1
      %p68 = scmp.eq.s32.totalorder %s18, 3
      %p69 = scmp.ne.s32.totalorder %s64, %s66
      %p70 = scmp.eq.s32.totalorder %s18, 0
      %p71 = por %p69, %p70
      %p72 = scmp.ne.s32.totalorder %s64, %s66
      %p73 = scmp.eq.s32.totalorder %s23, 3
      %p74 = por %p72, %p73
      %p75 = scmp.ne.s32.totalorder %s66, %s67
      %p76 = scmp.eq.s32.totalorder %s23, 0
      %p77 = por %p75, %p76
      %p78 = scmp.ne.s32.totalorder %s66, %s67
      %p79 = scmp.eq.s32.totalorder %s24, 3
      %p80 = por %p78, %p79
      %p82 = scmp.ne.s32.totalorder %s67, %s81
      %p83 = scmp.eq.s32.totalorder %s24, 0
      %p84 = por %p82, %p83
      %s85 = ssub.s32 %s26, %s33
      %p86 = scmp.eq.s32.totalorder %s85, 0
      %s88 = sadd.s32 %s87, 1
      %s89 = scalar_select %p86, %s87, %s88
      %p92 = pneg %p86
      %p93 = scmp.eq.s32.totalorder %s18, 3
      %p94 = por %p92, %p93
      %p95 = scmp.ne.s32.totalorder %s87, %s90
      %p96 = scmp.eq.s32.totalorder %s18, 0
      %p97 = por %p95, %p96
      %p98 = scmp.ne.s32.totalorder %s87, %s90
      %p99 = scmp.eq.s32.totalorder %s23, 3
      %p100 = por %p98, %p99
      %p101 = scmp.ne.s32.totalorder %s90, %s91
      %p102 = scmp.eq.s32.totalorder %s23, 0
      %p103 = por %p101, %p102
      %p104 = scmp.ne.s32.totalorder %s90, %s91
      %p105 = scmp.eq.s32.totalorder %s24, 3
      %p106 = por %p104, %p105
      %p108 = scmp.ne.s32.totalorder %s91, %s107
      %p109 = scmp.eq.s32.totalorder %s24, 0
      %p110 = por %p108, %p109
      %s111 = ssub.s32 %s26, %s33
      %p112 = scmp.eq.s32.totalorder %s111, 0
      %s114 = sadd.s32 %s113, 1
      %s115 = scalar_select %p112, %s113, %s114
      %p118 = pneg %p112
      %p119 = scmp.eq.s32.totalorder %s18, 3
      %p120 = por %p118, %p119
      %p121 = scmp.ne.s32.totalorder %s113, %s116
      %p122 = scmp.eq.s32.totalorder %s18, 0
      %p123 = por %p121, %p122
      %p124 = scmp.ne.s32.totalorder %s113, %s116
      %p125 = scmp.eq.s32.totalorder %s23, 3
      %p126 = por %p124, %p125
      %p127 = scmp.ne.s32.totalorder %s116, %s117
      %p128 = scmp.eq.s32.totalorder %s23, 0
      %p129 = por %p127, %p128
      %p130 = scmp.ne.s32.totalorder %s116, %s117
      %p131 = scmp.eq.s32.totalorder %s24, 3
      %p132 = por %p130, %p131
      %p134 = scmp.ne.s32.totalorder %s117, %s133
      %p135 = scmp.eq.s32.totalorder %s24, 0
      %p136 = por %p134, %p135
      %s137 = ssub.s32 %s26, %s33
      %p138 = scmp.eq.s32.totalorder %s137, 0
      %s140 = sadd.s32 %s139, 1
      %s141 = scalar_select %p138, %s139, %s140
      %p144 = pneg %p138
      %p145 = scmp.eq.s32.totalorder %s18, 3
      %p146 = por %p144, %p145
      %p147 = scmp.ne.s32.totalorder %s139, %s142
      %p148 = scmp.eq.s32.totalorder %s18, 0
      %p149 = por %p147, %p148
      %p150 = scmp.ne.s32.totalorder %s139, %s142
      %p151 = scmp.eq.s32.totalorder %s23, 3
      %p152 = por %p150, %p151
      %p153 = scmp.ne.s32.totalorder %s142, %s143
      %p154 = scmp.eq.s32.totalorder %s23, 0
      %p155 = por %p153, %p154
      %p156 = scmp.ne.s32.totalorder %s142, %s143
      %p157 = scmp.eq.s32.totalorder %s24, 3
      %p158 = por %p156, %p157
      %p160 = scmp.ne.s32.totalorder %s143, %s159
      %p161 = scmp.eq.s32.totalorder %s24, 0
      %p162 = por %p160, %p161
      %s163 = ssub.s32 %s26, %s33
      %p164 = scmp.eq.s32.totalorder %s163, 0
      %s166 = sadd.s32 %s165, 1
      %s167 = scalar_select %p164, %s165, %s166
      %p170 = pneg %p164
      %p171 = scmp.eq.s32.totalorder %s18, 3
      %p172 = por %p170, %p171
      %p173 = scmp.ne.s32.totalorder %s165, %s168
      %p174 = scmp.eq.s32.totalorder %s18, 0
      %p175 = por %p173, %p174
      %p176 = scmp.ne.s32.totalorder %s165, %s168
      %p177 = scmp.eq.s32.totalorder %s23, 3
      %p178 = por %p176, %p177
      %p179 = scmp.ne.s32.totalorder %s168, %s169
      %p180 = scmp.eq.s32.totalorder %s23, 0
      %p181 = por %p179, %p180
      %p182 = scmp.ne.s32.totalorder %s168, %s169
      %p183 = scmp.eq.s32.totalorder %s24, 3
      %p184 = por %p182, %p183
      %p186 = scmp.ne.s32.totalorder %s169, %s185
      %p187 = scmp.eq.s32.totalorder %s24, 0
      %p188 = por %p186, %p187
      %s189 = ssub.s32 %s26, %s33
      %p190 = scmp.eq.s32.totalorder %s189, 0
      %s192 = sadd.s32 %s191, 1
      %s193 = scalar_select %p190, %s191, %s192
      %p196 = pneg %p190
      %p197 = scmp.eq.s32.totalorder %s18, 3
      %p198 = por %p196, %p197
      %p199 = scmp.ne.s32.totalorder %s191, %s194
      %p200 = scmp.eq.s32.totalorder %s18, 0
      %p201 = por %p199, %p200
      %p202 = scmp.ne.s32.totalorder %s191, %s194
      %p203 = scmp.eq.s32.totalorder %s23, 3
      %p204 = por %p202, %p203
      %p205 = scmp.ne.s32.totalorder %s194, %s195
      %p206 = scmp.eq.s32.totalorder %s23, 0
      %p207 = por %p205, %p206
      %p208 = scmp.ne.s32.totalorder %s194, %s195
      %p209 = scmp.eq.s32.totalorder %s24, 3
      %p210 = por %p208, %p209
      %p212 = scmp.ne.s32.totalorder %s195, %s211
      %p213 = scmp.eq.s32.totalorder %s24, 0
      %p214 = por %p212, %p213
      %s215 = ssub.s32 %s26, %s33
      %p216 = scmp.eq.s32.totalorder %s215, 0
      %s218 = sadd.s32 %s217, 1
      %s219 = scalar_select %p216, %s217, %s218
      %p222 = pneg %p216
      %p223 = scmp.eq.s32.totalorder %s18, 3
      %p224 = por %p222, %p223
      %p225 = scmp.ne.s32.totalorder %s217, %s220
      %p226 = scmp.eq.s32.totalorder %s18, 0
      %p227 = por %p225, %p226
      %p228 = scmp.ne.s32.totalorder %s217, %s220
      %p229 = scmp.eq.s32.totalorder %s23, 3
      %p230 = por %p228, %p229
      %p231 = scmp.ne.s32.totalorder %s220, %s221
      %p232 = scmp.eq.s32.totalorder %s23, 0
      %p233 = por %p231, %p232
      %p234 = scmp.ne.s32.totalorder %s220, %s221
      %p235 = scmp.eq.s32.totalorder %s24, 3
      %p236 = por %p234, %p235
      %p238 = scmp.ne.s32.totalorder %s221, %s237
      %p239 = scmp.eq.s32.totalorder %s24, 0
      %p240 = por %p238, %p239
      %s242 = sadd.s32 %s241, 1
      %p245 = scmp.eq.s32.totalorder %s18, 3
      %p246 = scmp.ne.s32.totalorder %s241, %s243
      %p247 = scmp.eq.s32.totalorder %s18, 0
      %p248 = por %p246, %p247
      %p249 = scmp.ne.s32.totalorder %s241, %s243
      %p250 = scmp.eq.s32.totalorder %s23, 3
      %p251 = por %p249, %p250
      %p252 = scmp.ne.s32.totalorder %s243, %s244
      %p253 = scmp.eq.s32.totalorder %s23, 0
      %p254 = por %p252, %p253
      %p255 = scmp.ne.s32.totalorder %s243, %s244
      %p256 = scmp.eq.s32.totalorder %s24, 3
      %p257 = por %p255, %p256
      %p259 = scmp.ne.s32.totalorder %s244, %s258
      %p260 = scmp.eq.s32.totalorder %s24, 0
      %p261 = por %p259, %p260
      %s262 = ssub.s32 %s25, %s37
      %p263 = scmp.eq.s32.totalorder %s262, 0
      %s265 = sadd.s32 %s264, 1
      %s266 = scalar_select %p263, %s264, %s265
      %p269 = pneg %p263
      %p270 = scmp.eq.s32.totalorder %s18, 3
      %p271 = por %p269, %p270
      %p272 = scmp.ne.s32.totalorder %s264, %s267
      %p273 = scmp.eq.s32.totalorder %s18, 0
      %p274 = por %p272, %p273
      %p275 = scmp.ne.s32.totalorder %s264, %s267
      %p276 = scmp.eq.s32.totalorder %s23, 3
      %p277 = por %p275, %p276
      %p278 = scmp.ne.s32.totalorder %s267, %s268
      %p279 = scmp.eq.s32.totalorder %s23, 0
      %p280 = por %p278, %p279
      %p281 = scmp.ne.s32.totalorder %s267, %s268
      %p282 = scmp.eq.s32.totalorder %s24, 3
      %p283 = por %p281, %p282
      %p285 = scmp.ne.s32.totalorder %s268, %s284
      %p286 = scmp.eq.s32.totalorder %s24, 0
      %p287 = por %p285, %p286
      %p288 = scmp.le.s32.totalorder 1, %s18
      %p289 = scmp.lt.s32.totalorder %s18, 5
      %p290 = pnand %p288, %p289
      %p291 = pneg %p290
      // Predicated region
      $region9: #{tpu_custom_call.1} parent=5 // pred_check
        _
      $region10: #{tpu_custom_call.1} parent=5 // pred_check_branch
        %293 = sbr.rel (%p290) target = $region12
      $region11: #{tpu_custom_call.1} parent=5 // pred_region
        %s294 = ssub.s32 %s18, 1
        // Predicated region
        $region13: #{tpu_custom_call.1} parent=11 // pred_check
          %p295 = pneg %p77
        $region14: #{tpu_custom_call.1} parent=11 // pred_check_branch
          %297 = sbr.rel (%p295) target = $region16
        $region15: #{tpu_custom_call.1} parent=11 // pred_region
          _
        $region16: #{tpu_custom_call.1} parent=11 // pred_fallthru
          _
        // Predicated region
        $region17: #{tpu_custom_call.1} parent=11 // pred_check
          %p298 = pneg %p254
        $region18: #{tpu_custom_call.1} parent=11 // pred_check_branch
          %300 = sbr.rel (%p298) target = $region20
        $region19: #{tpu_custom_call.1} parent=11 // pred_region
          _
        $region20: #{tpu_custom_call.1} parent=11 // pred_fallthru
          _
      $region12: #{tpu_custom_call.1} parent=5 // pred_fallthru
        _
      %p301 = scmp.lt.s32.totalorder %s18, 4
      // Predicated region
      $region21: #{tpu_custom_call.1} parent=5 // pred_check
        %p302 = pneg %p301
      $region22: #{tpu_custom_call.1} parent=5 // pred_check_branch
        %304 = sbr.rel (%p302) target = $region24
      $region23: #{tpu_custom_call.1} parent=5 // pred_region
        // Predicated region
        $region25: #{tpu_custom_call.1} parent=23 // pred_check
          %p305 = pneg %p50
        $region26: #{tpu_custom_call.1} parent=23 // pred_check_branch
          %307 = sbr.rel (%p305) target = $region28
        $region27: #{tpu_custom_call.1} parent=23 // pred_region
          %p308 = scmp.lt.s32.totalorder %s25, 1
          %s309 = scalar_select %p308, %s25, 1
          %s310 = smul.addr %s309, 8
          %s311 = scalar_lea.vmem %s0, %s310
        $region28: #{tpu_custom_call.1} parent=23 // pred_fallthru
          _
        // Predicated region
        $region29: #{tpu_custom_call.1} parent=23 // pred_check
          %p312 = pneg %p97
        $region30: #{tpu_custom_call.1} parent=23 // pred_check_branch
          %314 = sbr.rel (%p312) target = $region32
        $region31: #{tpu_custom_call.1} parent=23 // pred_region
          %p315 = scmp.lt.s32.totalorder %s26, 1
          %s316 = scalar_select %p315, %s26, 1
          %s317 = smul.addr %s316, 8
          %s318 = scalar_lea.vmem %s2, %s317
        $region32: #{tpu_custom_call.1} parent=23 // pred_fallthru
          _
        // Predicated region
        $region33: #{tpu_custom_call.1} parent=23 // pred_check
          %p319 = pneg %p123
        $region34: #{tpu_custom_call.1} parent=23 // pred_check_branch
          %321 = sbr.rel (%p319) target = $region36
        $region35: #{tpu_custom_call.1} parent=23 // pred_region
          %p322 = scmp.lt.s32.totalorder %s26, 1
          %s323 = scalar_select %p322, %s26, 1
          %s324 = smul.addr %s323, 2
          %s325 = scalar_lea.vmem %s3, %s324
        $region36: #{tpu_custom_call.1} parent=23 // pred_fallthru
          _
        // Predicated region
        $region37: #{tpu_custom_call.1} parent=23 // pred_check
          %p326 = pneg %p149
        $region38: #{tpu_custom_call.1} parent=23 // pred_check_branch
          %328 = sbr.rel (%p326) target = $region40
        $region39: #{tpu_custom_call.1} parent=23 // pred_region
          %p329 = scmp.lt.s32.totalorder %s26, 1
          %s330 = scalar_select %p329, %s26, 1
          %s331 = smul.addr %s330, 4
          %s332 = smul.addr %s331, 4
          %s333 = scalar_lea.vmem %s4, %s332
        $region40: #{tpu_custom_call.1} parent=23 // pred_fallthru
          _
        // Predicated region
        $region41: #{tpu_custom_call.1} parent=23 // pred_check
          %p334 = pneg %p175
        $region42: #{tpu_custom_call.1} parent=23 // pred_check_branch
          %336 = sbr.rel (%p334) target = $region44
        $region43: #{tpu_custom_call.1} parent=23 // pred_region
          %p337 = scmp.lt.s32.totalorder %s26, 1
          %s338 = scalar_select %p337, %s26, 1
          %s339 = smul.addr %s338, 4
          %s340 = smul.addr %s339, 4
          %s341 = scalar_lea.vmem %s5, %s340
        $region44: #{tpu_custom_call.1} parent=23 // pred_fallthru
          _
        // Predicated region
        $region45: #{tpu_custom_call.1} parent=23 // pred_check
          %p342 = pneg %p201
        $region46: #{tpu_custom_call.1} parent=23 // pred_check_branch
          %344 = sbr.rel (%p342) target = $region48
        $region47: #{tpu_custom_call.1} parent=23 // pred_region
          %p345 = scmp.lt.s32.totalorder %s26, 1
          %s346 = scalar_select %p345, %s26, 1
          %s347 = smul.addr %s346, 4
          %s348 = smul.addr %s347, 4
          %s349 = scalar_lea.vmem %s6, %s348
        $region48: #{tpu_custom_call.1} parent=23 // pred_fallthru
          _
        // Predicated region
        $region49: #{tpu_custom_call.1} parent=23 // pred_check
          %p350 = pneg %p227
        $region50: #{tpu_custom_call.1} parent=23 // pred_check_branch
          %352 = sbr.rel (%p350) target = $region52
        $region51: #{tpu_custom_call.1} parent=23 // pred_region
          %p353 = scmp.lt.s32.totalorder %s26, 1
          %s354 = scalar_select %p353, %s26, 1
          %s355 = smul.addr %s354, 16
          %s356 = smul.addr %s355, 4
          %s357 = scalar_lea.vmem %s7, %s356
        $region52: #{tpu_custom_call.1} parent=23 // pred_fallthru
          _
      $region24: #{tpu_custom_call.1} parent=5 // pred_fallthru
        _
      %p358 = scmp.le.s32.totalorder 1, %s18
      %p359 = scmp.lt.s32.totalorder %s18, 5
      %p360 = pnand %p358, %p359
      %p361 = pneg %p360
      // Predicated region
      $region53: #{tpu_custom_call.1} parent=5 // pred_check
        _
      $region54: #{tpu_custom_call.1} parent=5 // pred_check_branch
        %363 = sbr.rel (%p360) target = $region56
      $region55: #{tpu_custom_call.1} parent=5 // pred_region
        %s364 = ssub.s32 %s18, 1
        %p365 = scmp.lt.s32.totalorder %s27, 1
        %s366 = scalar_select %p365, %s27, 1
        %s367 = smul.addr %s366, 8
        %s368 = scalar_lea.vmem %s0, %s367
        %p369 = pneg %p56
        %p370 = pneg %p53
        %p371 = pneg %p77
        %p372 = pneg %p74
        %p373 = scmp.lt.s32.totalorder %s28, 1
        %s374 = scalar_select %p373, %s28, 1
        %s375 = smul.addr %s374, 8
        %s376 = scalar_lea.vmem %s2, %s375
        %p377 = pneg %p103
        %p378 = pneg %p100
        %p379 = scmp.lt.s32.totalorder %s28, 1
        %s380 = scalar_select %p379, %s28, 1
        %s381 = smul.addr %s380, 2
        %s382 = scalar_lea.vmem %s3, %s381
        %p383 = pneg %p129
        %p384 = pneg %p126
        %p385 = scmp.lt.s32.totalorder %s28, 1
        %s386 = scalar_select %p385, %s28, 1
        %s387 = smul.addr %s386, 4
        %s388 = smul.addr %s387, 4
        %s389 = scalar_lea.vmem %s4, %s388
        %p390 = pneg %p155
        %p391 = pneg %p152
        %p392 = scmp.lt.s32.totalorder %s28, 1
        %s393 = scalar_select %p392, %s28, 1
        %s394 = smul.addr %s393, 4
        %s395 = smul.addr %s394, 4
        %s396 = scalar_lea.vmem %s5, %s395
        %p397 = pneg %p181
        %p398 = pneg %p178
        %p399 = scmp.lt.s32.totalorder %s28, 1
        %s400 = scalar_select %p399, %s28, 1
        %s401 = smul.addr %s400, 4
        %s402 = smul.addr %s401, 4
        %s403 = scalar_lea.vmem %s6, %s402
        %p404 = pneg %p207
        %p405 = pneg %p204
        %p406 = scmp.lt.s32.totalorder %s28, 1
        %s407 = scalar_select %p406, %s28, 1
        %s408 = smul.addr %s407, 16
        %s409 = smul.addr %s408, 4
        %s410 = scalar_lea.vmem %s7, %s409
        %p411 = pneg %p233
        %p412 = pneg %p230
        %p413 = pneg %p254
        %p414 = pneg %p251
        %p415 = pneg %p280
        %p416 = pneg %p277
        %s417 = sand.u32 %s267, 1
        %s418 = scalar_lea.sflag [#allocation3], %s417
        %s419 = sand.u32 %s267, 1
        %s420 = smul.addr %s419, 8
        %s421 = scalar_lea.vmem [#allocation2], %s420
        %p422 = scmp.lt.s32.totalorder %s27, 1
        %s423 = scalar_select %p422, %s27, 1
        %s424 = smul.addr %s423, 8
        %s425 = scalar_lea.vmem %s0, %s424
        %p426 = scmp.lt.s32.totalorder %s28, 1
        %s427 = scalar_select %p426, %s28, 1
        %s428 = smul.addr %s427, 8
        %s429 = scalar_lea.vmem %s2, %s428
        %p430 = scmp.lt.s32.totalorder %s28, 1
        %s431 = scalar_select %p430, %s28, 1
        %s432 = smul.addr %s431, 2
        %s433 = scalar_lea.vmem %s3, %s432
        %p434 = scmp.lt.s32.totalorder %s28, 1
        %s435 = scalar_select %p434, %s28, 1
        %s436 = smul.addr %s435, 4
        %s437 = smul.addr %s436, 4
        %s438 = scalar_lea.vmem %s4, %s437
        %p439 = scmp.lt.s32.totalorder %s28, 1
        %s440 = scalar_select %p439, %s28, 1
        %s441 = smul.addr %s440, 4
        %s442 = smul.addr %s441, 4
        %s443 = scalar_lea.vmem %s5, %s442
        %p444 = scmp.lt.s32.totalorder %s28, 1
        %s445 = scalar_select %p444, %s28, 1
        %s446 = smul.addr %s445, 4
        %s447 = smul.addr %s446, 4
        %s448 = scalar_lea.vmem %s6, %s447
        %p449 = scmp.lt.s32.totalorder %s28, 1
        %s450 = scalar_select %p449, %s28, 1
        %s451 = smul.addr %s450, 16
        %s452 = smul.addr %s451, 4
        %s453 = scalar_lea.vmem %s7, %s452
        %p459 = scmp.eq.s32.totalorder %s28, 0
        // Predicated region
        $region57: #{tpu_custom_call.1} parent=55 // pred_check
          %p460 = pneg %p459
        $region58: #{tpu_custom_call.1} parent=55 // pred_check_branch
          %462 = sbr.rel (%p460) target = $region60
        $region59: #{tpu_custom_call.1} parent=55 // pred_region
          %v463 = vld [vmem:[%s425] sm:$0xff]
          %vm464 = vcmask 261120
          %465 = vst.msk [vmem:[%s421] sm:$0xff] %vm464, %v463
        $region60: #{tpu_custom_call.1} parent=55 // pred_fallthru
          _
        %v466 = vld [vmem:[%s421] sm:$0xff]
        %v467 = vld [vmem:[%s429] sm:$0xff]
        %v468 = vld [vmem:[%s433] sm:$0x3]
        %vm469 = vcmask 261120
        %v470 = vsel %vm469, %v466, 0.0
        %471 = vadd.xlane.f32.xlu0 %v470
        %v472 = vpop.xlane.xlu0 %471
        %v473 = vrcp.pop 32.0
        %v474 = vmul.f32 %v472, %v473
        %v475 = vsub.f32 %v466, %v474
        %v476 = vmul.f32 %v475, %v475
        %v477 = vsel %vm469, %v476, 0.0
        %478 = vadd.xlane.f32.xlu0 %v477
        %v479 = vpop.xlane.xlu0 %478
        %v480 = vmul.f32 %v479, %v473
        %v481 = vadd.f32 %v480, 1e-05
        %v482 = vrsqrt.pop %v481
        %v483 = vmul.f32 %v475, %v482
        %v484 = vlaneseq
        %v485 = vshrl.u32 %v484, 7
        %v486 = vsub.s32 0, %v485
        %v487 = vrot.slane %v467, %v486
        %v488 = vmul.f32 %v483, %v487
        %v489 = vlaneseq
        %v490 = vshrl.u32 %v489, 7
        %v491 = vsub.s32 1, %v490
        %v492 = vrot.slane %v467, %v491
        %v493 = vadd.f32 %v488, %v492
        %v494 = vpack.c.bf16 %v493, %v493
        %v495 = vld [vmem:[%s438] sm:$0xf]
        %v496 = vld [vmem:[%s438 + $0x4] sm:$0xf]
        %v497 = vld [vmem:[%s438 + $0x8] sm:$0xf]
        %v498 = vld [vmem:[%s438 + $0xc] sm:$0xf]
        %v500 = vlaneseq
        %v501 = vshrl.u32 %v500, 7
        %v502 = vsub.s32 0, %v501
        %v503 = vrot.slane %v468, %v502
        %v509 = vunpack.c.l.b16 %v495
        %v510 = vunpack.c.l.b16 %v496
        %v511 = vunpack.c.l.b16 %v497
        %v512 = vunpack.c.l.b16 %v498
        %v513 = vpack.c.b16 %v510, %v509
        %v514 = vpack.c.b16 %v512, %v511
        %v518 = vsel %vm469, %v494, 0
        %520 = vmatprep.subr.bf16.mxu0 0
        %521 = vmatpush1.bf16.msra.mxu0 %v513
        %522 = vmatprep.subr.bf16.mxu0 0
        %523 = vmatpush1.bf16.msra.mxu0 %v514
        %524 = vmatprep.subr.bf16.mxu0 0
        %525 = vmatpush1.bf16.msra.mxu0 0
        %526 = vmatprep.subr.bf16.mxu0 0
        %527 = vmatpush1.bf16.msra.mxu0 0
        %528 = vmatprep.subr.bf16.mxu0 0
        %529 = vmatpush1.bf16.msra.mxu0 0
        %530 = vmatprep.subr.bf16.mxu0 0
        %531 = vmatpush1.bf16.msra.mxu0 0
        %532 = vmatprep.subr.bf16.mxu0 0
        %533 = vmatpush1.bf16.msra.mxu0 0
        %534 = vmatprep.subr.bf16.mxu0 0
        %535 = vmatpush1.bf16.msra.mxu0 0
        %536 = vmatprep.subr.bf16.mxu0 0
        %537 = vmatpush1.bf16.msra.mxu0 0
        %538 = vmatprep.subr.bf16.mxu0 0
        %539 = vmatpush1.bf16.msra.mxu0 0
        %540 = vmatprep.subr.bf16.mxu0 0
        %541 = vmatpush1.bf16.msra.mxu0 0
        %542 = vmatprep.subr.bf16.mxu0 0
        %543 = vmatpush1.bf16.msra.mxu0 0
        %544 = vmatprep.subr.bf16.mxu0 0
        %545 = vmatpush1.bf16.msra.mxu0 0
        %546 = vmatprep.subr.bf16.mxu0 0
        %547 = vmatpush1.bf16.msra.mxu0 0
        %548 = vmatprep.subr.bf16.mxu0 0
        %549 = vmatpush1.bf16.msra.mxu0 0
        %550 = vmatprep.subr.bf16.mxu0 0
        %551 = vmatpush1.bf16.msra.mxu0 0
        %552 = vmatprep.mubr.bf16.mxu0 0
        %553 = vmatmul.mubr.bf16.gmra.mrb[0].mxu0 %v518
        %v554 = vpop.f32.mrb[0].mxu0
        %v555 = vadd.f32 %v503, %v554
        %v556 = vpop.f32.mrb[0].mxu0
        %v557 = vpop.f32.mrb[0].mxu0
        %v558 = vpop.f32.mrb[0].mxu0
        %559 = vdwg.mxu0
        %v560 = vmul.f32 %v555, 0.35355338
        %v561 = vpack.c.bf16 %v560, %v560
        %v562 = vpack.c.bf16 %v555, %v555
        %v563 = vld [vmem:[%s1] sm:$0xff]
        %565 = vrot.lane.b32.xlu0 %v562, 96
        %v566 = vpop.permute.xlu0 %565
        %vm567 = vcmask 64512
        %v569 = vsel %vm567, %v561, 0
        %v572 = vsel %vm567, %v566, 0
        %574 = vmatprep.subr.bf16.mxu0 0
        %575 = vmatpush1.bf16.xpose.msra.mxu0 %v572
        %576 = vmatprep.subr.bf16.mxu0 0
        %577 = vmatpush1.bf16.xpose.msra.mxu0 0
        %578 = vmatprep.subr.bf16.mxu0 0
        %579 = vmatpush1.bf16.xpose.msra.mxu0 0
        %580 = vmatprep.subr.bf16.mxu0 0
        %581 = vmatpush1.bf16.xpose.msra.mxu0 0
        %582 = vmatprep.subr.bf16.mxu0 0
        %583 = vmatpush1.bf16.xpose.msra.mxu0 0
        %584 = vmatprep.subr.bf16.mxu0 0
        %585 = vmatpush1.bf16.xpose.msra.mxu0 0
        %586 = vmatprep.subr.bf16.mxu0 0
        %587 = vmatpush1.bf16.xpose.msra.mxu0 0
        %588 = vmatprep.subr.bf16.mxu0 0
        %589 = vmatpush1.bf16.xpose.msra.mxu0 0
        %590 = vmatprep.subr.bf16.mxu0 0
        %591 = vmatpush1.bf16.xpose.msra.mxu0 0
        %592 = vmatprep.subr.bf16.mxu0 0
        %593 = vmatpush1.bf16.xpose.msra.mxu0 0
        %594 = vmatprep.subr.bf16.mxu0 0
        %595 = vmatpush1.bf16.xpose.msra.mxu0 0
        %596 = vmatprep.subr.bf16.mxu0 0
        %597 = vmatpush1.bf16.xpose.msra.mxu0 0
        %598 = vmatprep.subr.bf16.mxu0 0
        %599 = vmatpush1.bf16.xpose.msra.mxu0 0
        %600 = vmatprep.subr.bf16.mxu0 0
        %601 = vmatpush1.bf16.xpose.msra.mxu0 0
        %602 = vmatprep.subr.bf16.mxu0 0
        %603 = vmatpush1.bf16.xpose.msra.mxu0 0
        %604 = vmatprep.subr.bf16.mxu0 0
        %605 = vmatpush1.bf16.xpose.msra.mxu0 0
        %606 = vmatprep.mubr.bf16.mxu0 0
        %607 = vmatmul.mubr.bf16.gmra.mrb[0].mxu0 %v569
        %v608 = vpop.f32.mrb[0].mxu0
        %v609 = vadd.f32 %v563, %v608
        %v610 = vpop.f32.mrb[0].mxu0
        %v611 = vpop.f32.mrb[0].mxu0
        %v612 = vpop.f32.mrb[0].mxu0
        %613 = vdwg.mxu0
        %v614 = vsel %vm567, %v609, -inf
        %615 = vmax.xlane.f32.xlu0 %v614
        %v616 = vpop.xlane.xlu0 %615
        %v617 = vsub.f32 %v609, %v616
        %v618 = vmul.f32 %v617, 1.442695
        %v619 = vpow.pop %v618
        %v620 = vsel %vm567, %v619, 0.0
        %621 = vadd.xlane.f32.xlu0 %v620
        %v622 = vpop.xlane.xlu0 %621
        %v623 = vrcp.pop %v622
        %v624 = vmul.f32 %v619, %v623
        %v625 = vpack.c.bf16 %v624, %v624
        %626 = vrot.lane.b32.xlu0 %v562, 64
        %v627 = vpop.permute.xlu0 %626
        %v629 = vsel %vm567, %v625, 0
        %vm631 = vcmask 1043456
        %v633 = vsel %vm631, %v627, 0
        %635 = vmatprep.subr.bf16.mxu0 0
        %636 = vmatpush1.bf16.msra.mxu0 %v633
        %637 = vmatprep.subr.bf16.mxu0 0
        %638 = vmatpush1.bf16.msra.mxu0 0
        %639 = vmatprep.subr.bf16.mxu0 0
        %640 = vmatpush1.bf16.msra.mxu0 0
        %641 = vmatprep.subr.bf16.mxu0 0
        %642 = vmatpush1.bf16.msra.mxu0 0
        %643 = vmatprep.subr.bf16.mxu0 0
        %644 = vmatpush1.bf16.msra.mxu0 0
        %645 = vmatprep.subr.bf16.mxu0 0
        %646 = vmatpush1.bf16.msra.mxu0 0
        %647 = vmatprep.subr.bf16.mxu0 0
        %648 = vmatpush1.bf16.msra.mxu0 0
        %649 = vmatprep.subr.bf16.mxu0 0
        %650 = vmatpush1.bf16.msra.mxu0 0
        %651 = vmatprep.subr.bf16.mxu0 0
        %652 = vmatpush1.bf16.msra.mxu0 0
        %653 = vmatprep.subr.bf16.mxu0 0
        %654 = vmatpush1.bf16.msra.mxu0 0
        %655 = vmatprep.subr.bf16.mxu0 0
        %656 = vmatpush1.bf16.msra.mxu0 0
        %657 = vmatprep.subr.bf16.mxu0 0
        %658 = vmatpush1.bf16.msra.mxu0 0
        %659 = vmatprep.subr.bf16.mxu0 0
        %660 = vmatpush1.bf16.msra.mxu0 0
        %661 = vmatprep.subr.bf16.mxu0 0
        %662 = vmatpush1.bf16.msra.mxu0 0
        %663 = vmatprep.subr.bf16.mxu0 0
        %664 = vmatpush1.bf16.msra.mxu0 0
        %665 = vmatprep.subr.bf16.mxu0 0
        %666 = vmatpush1.bf16.msra.mxu0 0
        %667 = vmatprep.mubr.bf16.mxu0 0
        %668 = vmatmul.mubr.bf16.gmra.mrb[0].mxu0 %v629
        %v669 = vpop.f32.mrb[0].mxu0
        %v670 = vadd.f32 0.0, %v669
        %v671 = vpop.f32.mrb[0].mxu0
        %v672 = vpop.f32.mrb[0].mxu0
        %v673 = vpop.f32.mrb[0].mxu0
        %674 = vdwg.mxu0
        %v675 = vpack.c.bf16 %v670, %v670
        %677 = vrot.lane.b32.xlu0 %v561, 120
        %v678 = vpop.permute.xlu0 %677
        %679 = vrot.lane.b32.xlu0 %v562, 88
        %v680 = vpop.permute.xlu0 %679
        %v682 = vsel %vm567, %v678, 0
        %v685 = vsel %vm567, %v680, 0
        %687 = vmatprep.subr.bf16.mxu0 0
        %688 = vmatpush1.bf16.xpose.msra.mxu0 %v685
        %689 = vmatprep.subr.bf16.mxu0 0
        %690 = vmatpush1.bf16.xpose.msra.mxu0 0
        %691 = vmatprep.subr.bf16.mxu0 0
        %692 = vmatpush1.bf16.xpose.msra.mxu0 0
        %693 = vmatprep.subr.bf16.mxu0 0
        %694 = vmatpush1.bf16.xpose.msra.mxu0 0
        %695 = vmatprep.subr.bf16.mxu0 0
        %696 = vmatpush1.bf16.xpose.msra.mxu0 0
        %697 = vmatprep.subr.bf16.mxu0 0
        %698 = vmatpush1.bf16.xpose.msra.mxu0 0
        %699 = vmatprep.subr.bf16.mxu0 0
        %700 = vmatpush1.bf16.xpose.msra.mxu0 0
        %701 = vmatprep.subr.bf16.mxu0 0
        %702 = vmatpush1.bf16.xpose.msra.mxu0 0
        %703 = vmatprep.subr.bf16.mxu0 0
        %704 = vmatpush1.bf16.xpose.msra.mxu0 0
        %705 = vmatprep.subr.bf16.mxu0 0
        %706 = vmatpush1.bf16.xpose.msra.mxu0 0
        %707 = vmatprep.subr.bf16.mxu0 0
        %708 = vmatpush1.bf16.xpose.msra.mxu0 0
        %709 = vmatprep.subr.bf16.mxu0 0
        %710 = vmatpush1.bf16.xpose.msra.mxu0 0
        %711 = vmatprep.subr.bf16.mxu0 0
        %712 = vmatpush1.bf16.xpose.msra.mxu0 0
        %713 = vmatprep.subr.bf16.mxu0 0
        %714 = vmatpush1.bf16.xpose.msra.mxu0 0
        %715 = vmatprep.subr.bf16.mxu0 0
        %716 = vmatpush1.bf16.xpose.msra.mxu0 0
        %717 = vmatprep.subr.bf16.mxu0 0
        %718 = vmatpush1.bf16.xpose.msra.mxu0 0
        %719 = vmatprep.mubr.bf16.mxu0 0
        %720 = vmatmul.mubr.bf16.gmra.mrb[0].mxu0 %v682
        %v721 = vpop.f32.mrb[0].mxu0
        %v722 = vadd.f32 %v563, %v721
        %v723 = vpop.f32.mrb[0].mxu0
        %v724 = vpop.f32.mrb[0].mxu0
        %v725 = vpop.f32.mrb[0].mxu0
        %726 = vdwg.mxu0
        %v727 = vsel %vm567, %v722, -inf
        %728 = vmax.xlane.f32.xlu0 %v727
        %v729 = vpop.xlane.xlu0 %728
        %v730 = vsub.f32 %v722, %v729
        %v731 = vmul.f32 %v730, 1.442695
        %v732 = vpow.pop %v731
        %v733 = vsel %vm567, %v732, 0.0
        %734 = vadd.xlane.f32.xlu0 %v733
        %v735 = vpop.xlane.xlu0 %734
        %v736 = vrcp.pop %v735
        %v737 = vmul.f32 %v732, %v736
        %v738 = vpack.c.bf16 %v737, %v737
        %739 = vrot.lane.b32.xlu0 %v562, 56
        %v740 = vpop.permute.xlu0 %739
        %v742 = vsel %vm567, %v738, 0
        %v745 = vsel %vm631, %v740, 0
        %747 = vmatprep.subr.bf16.mxu0 0
        %748 = vmatpush1.bf16.msra.mxu0 %v745
        %749 = vmatprep.subr.bf16.mxu0 0
        %750 = vmatpush1.bf16.msra.mxu0 0
        %751 = vmatprep.subr.bf16.mxu0 0
        %752 = vmatpush1.bf16.msra.mxu0 0
        %753 = vmatprep.subr.bf16.mxu0 0
        %754 = vmatpush1.bf16.msra.mxu0 0
        %755 = vmatprep.subr.bf16.mxu0 0
        %756 = vmatpush1.bf16.msra.mxu0 0
        %757 = vmatprep.subr.bf16.mxu0 0
        %758 = vmatpush1.bf16.msra.mxu0 0
        %759 = vmatprep.subr.bf16.mxu0 0
        %760 = vmatpush1.bf16.msra.mxu0 0
        %761 = vmatprep.subr.bf16.mxu0 0
        %762 = vmatpush1.bf16.msra.mxu0 0
        %763 = vmatprep.subr.bf16.mxu0 0
        %764 = vmatpush1.bf16.msra.mxu0 0
        %765 = vmatprep.subr.bf16.mxu0 0
        %766 = vmatpush1.bf16.msra.mxu0 0
        %767 = vmatprep.subr.bf16.mxu0 0
        %768 = vmatpush1.bf16.msra.mxu0 0
        %769 = vmatprep.subr.bf16.mxu0 0
        %770 = vmatpush1.bf16.msra.mxu0 0
        %771 = vmatprep.subr.bf16.mxu0 0
        %772 = vmatpush1.bf16.msra.mxu0 0
        %773 = vmatprep.subr.bf16.mxu0 0
        %774 = vmatpush1.bf16.msra.mxu0 0
        %775 = vmatprep.subr.bf16.mxu0 0
        %776 = vmatpush1.bf16.msra.mxu0 0
        %777 = vmatprep.subr.bf16.mxu0 0
        %778 = vmatpush1.bf16.msra.mxu0 0
        %779 = vmatprep.mubr.bf16.mxu0 0
        %780 = vmatmul.mubr.bf16.gmra.mrb[0].mxu0 %v742
        %v781 = vpop.f32.mrb[0].mxu0
        %v782 = vadd.f32 0.0, %v781
        %v783 = vpop.f32.mrb[0].mxu0
        %v784 = vpop.f32.mrb[0].mxu0
        %v785 = vpop.f32.mrb[0].mxu0
        %786 = vdwg.mxu0
        %v787 = vpack.c.bf16 %v782, %v782
        %788 = vrot.lane.b32.xlu0 %v561, 112
        %v789 = vpop.permute.xlu0 %788
        %790 = vrot.lane.b32.xlu0 %v562, 80
        %v791 = vpop.permute.xlu0 %790
        %v793 = vsel %vm567, %v789, 0
        %v796 = vsel %vm567, %v791, 0
        %798 = vmatprep.subr.bf16.mxu0 0
        %799 = vmatpush1.bf16.xpose.msra.mxu0 %v796
        %800 = vmatprep.subr.bf16.mxu0 0
        %801 = vmatpush1.bf16.xpose.msra.mxu0 0
        %802 = vmatprep.subr.bf16.mxu0 0
        %803 = vmatpush1.bf16.xpose.msra.mxu0 0
        %804 = vmatprep.subr.bf16.mxu0 0
        %805 = vmatpush1.bf16.xpose.msra.mxu0 0
        %806 = vmatprep.subr.bf16.mxu0 0
        %807 = vmatpush1.bf16.xpose.msra.mxu0 0
        %808 = vmatprep.subr.bf16.mxu0 0
        %809 = vmatpush1.bf16.xpose.msra.mxu0 0
        %810 = vmatprep.subr.bf16.mxu0 0
        %811 = vmatpush1.bf16.xpose.msra.mxu0 0
        %812 = vmatprep.subr.bf16.mxu0 0
        %813 = vmatpush1.bf16.xpose.msra.mxu0 0
        %814 = vmatprep.subr.bf16.mxu0 0
        %815 = vmatpush1.bf16.xpose.msra.mxu0 0
        %816 = vmatprep.subr.bf16.mxu0 0
        %817 = vmatpush1.bf16.xpose.msra.mxu0 0
        %818 = vmatprep.subr.bf16.mxu0 0
        %819 = vmatpush1.bf16.xpose.msra.mxu0 0
        %820 = vmatprep.subr.bf16.mxu0 0
        %821 = vmatpush1.bf16.xpose.msra.mxu0 0
        %822 = vmatprep.subr.bf16.mxu0 0
        %823 = vmatpush1.bf16.xpose.msra.mxu0 0
        %824 = vmatprep.subr.bf16.mxu0 0
        %825 = vmatpush1.bf16.xpose.msra.mxu0 0
        %826 = vmatprep.subr.bf16.mxu0 0
        %827 = vmatpush1.bf16.xpose.msra.mxu0 0
        %828 = vmatprep.subr.bf16.mxu0 0
        %829 = vmatpush1.bf16.xpose.msra.mxu0 0
        %830 = vmatprep.mubr.bf16.mxu0 0
        %831 = vmatmul.mubr.bf16.gmra.mrb[0].mxu0 %v793
        %v832 = vpop.f32.mrb[0].mxu0
        %v833 = vadd.f32 %v563, %v832
        %v834 = vpop.f32.mrb[0].mxu0
        %v835 = vpop.f32.mrb[0].mxu0
        %v836 = vpop.f32.mrb[0].mxu0
        %837 = vdwg.mxu0
        %v838 = vsel %vm567, %v833, -inf
        %839 = vmax.xlane.f32.xlu0 %v838
        %v840 = vpop.xlane.xlu0 %839
        %v841 = vsub.f32 %v833, %v840
        %v842 = vmul.f32 %v841, 1.442695
        %v843 = vpow.pop %v842
        %v844 = vsel %vm567, %v843, 0.0
        %845 = vadd.xlane.f32.xlu0 %v844
        %v846 = vpop.xlane.xlu0 %845
        %v847 = vrcp.pop %v846
        %v848 = vmul.f32 %v843, %v847
        %v849 = vpack.c.bf16 %v848, %v848
        %850 = vrot.lane.b32.xlu0 %v562, 48
        %v851 = vpop.permute.xlu0 %850
        %v853 = vsel %vm567, %v849, 0
        %v856 = vsel %vm631, %v851, 0
        %858 = vmatprep.subr.bf16.mxu0 0
        %859 = vmatpush1.bf16.msra.mxu0 %v856
        %860 = vmatprep.subr.bf16.mxu0 0
        %861 = vmatpush1.bf16.msra.mxu0 0
        %862 = vmatprep.subr.bf16.mxu0 0
        %863 = vmatpush1.bf16.msra.mxu0 0
        %864 = vmatprep.subr.bf16.mxu0 0
        %865 = vmatpush1.bf16.msra.mxu0 0
        %866 = vmatprep.subr.bf16.mxu0 0
        %867 = vmatpush1.bf16.msra.mxu0 0
        %868 = vmatprep.subr.bf16.mxu0 0
        %869 = vmatpush1.bf16.msra.mxu0 0
        %870 = vmatprep.subr.bf16.mxu0 0
        %871 = vmatpush1.bf16.msra.mxu0 0
        %872 = vmatprep.subr.bf16.mxu0 0
        %873 = vmatpush1.bf16.msra.mxu0 0
        %874 = vmatprep.subr.bf16.mxu0 0
        %875 = vmatpush1.bf16.msra.mxu0 0
        %876 = vmatprep.subr.bf16.mxu0 0
        %877 = vmatpush1.bf16.msra.mxu0 0
        %878 = vmatprep.subr.bf16.mxu0 0
        %879 = vmatpush1.bf16.msra.mxu0 0
        %880 = vmatprep.subr.bf16.mxu0 0
        %881 = vmatpush1.bf16.msra.mxu0 0
        %882 = vmatprep.subr.bf16.mxu0 0
        %883 = vmatpush1.bf16.msra.mxu0 0
        %884 = vmatprep.subr.bf16.mxu0 0
        %885 = vmatpush1.bf16.msra.mxu0 0
        %886 = vmatprep.subr.bf16.mxu0 0
        %887 = vmatpush1.bf16.msra.mxu0 0
        %888 = vmatprep.subr.bf16.mxu0 0
        %889 = vmatpush1.bf16.msra.mxu0 0
        %890 = vmatprep.mubr.bf16.mxu0 0
        %891 = vmatmul.mubr.bf16.gmra.mrb[0].mxu0 %v853
        %v892 = vpop.f32.mrb[0].mxu0
        %v893 = vadd.f32 0.0, %v892
        %v894 = vpop.f32.mrb[0].mxu0
        %v895 = vpop.f32.mrb[0].mxu0
        %v896 = vpop.f32.mrb[0].mxu0
        %897 = vdwg.mxu0
        %v898 = vpack.c.bf16 %v893, %v893
        %899 = vrot.lane.b32.xlu0 %v561, 104
        %v900 = vpop.permute.xlu0 %899
        %901 = vrot.lane.b32.xlu0 %v562, 72
        %v902 = vpop.permute.xlu0 %901
        %v904 = vsel %vm567, %v900, 0
        %v907 = vsel %vm567, %v902, 0
        %909 = vmatprep.subr.bf16.mxu0 0
        %910 = vmatpush1.bf16.xpose.msra.mxu0 %v907
        %911 = vmatprep.subr.bf16.mxu0 0
        %912 = vmatpush1.bf16.xpose.msra.mxu0 0
        %913 = vmatprep.subr.bf16.mxu0 0
        %914 = vmatpush1.bf16.xpose.msra.mxu0 0
        %915 = vmatprep.subr.bf16.mxu0 0
        %916 = vmatpush1.bf16.xpose.msra.mxu0 0
        %917 = vmatprep.subr.bf16.mxu0 0
        %918 = vmatpush1.bf16.xpose.msra.mxu0 0
        %919 = vmatprep.subr.bf16.mxu0 0
        %920 = vmatpush1.bf16.xpose.msra.mxu0 0
        %921 = vmatprep.subr.bf16.mxu0 0
        %922 = vmatpush1.bf16.xpose.msra.mxu0 0
        %923 = vmatprep.subr.bf16.mxu0 0
        %924 = vmatpush1.bf16.xpose.msra.mxu0 0
        %925 = vmatprep.subr.bf16.mxu0 0
        %926 = vmatpush1.bf16.xpose.msra.mxu0 0
        %927 = vmatprep.subr.bf16.mxu0 0
        %928 = vmatpush1.bf16.xpose.msra.mxu0 0
        %929 = vmatprep.subr.bf16.mxu0 0
        %930 = vmatpush1.bf16.xpose.msra.mxu0 0
        %931 = vmatprep.subr.bf16.mxu0 0
        %932 = vmatpush1.bf16.xpose.msra.mxu0 0
        %933 = vmatprep.subr.bf16.mxu0 0
        %934 = vmatpush1.bf16.xpose.msra.mxu0 0
        %935 = vmatprep.subr.bf16.mxu0 0
        %936 = vmatpush1.bf16.xpose.msra.mxu0 0
        %937 = vmatprep.subr.bf16.mxu0 0
        %938 = vmatpush1.bf16.xpose.msra.mxu0 0
        %939 = vmatprep.subr.bf16.mxu0 0
        %940 = vmatpush1.bf16.xpose.msra.mxu0 0
        %941 = vmatprep.mubr.bf16.mxu0 0
        %942 = vmatmul.mubr.bf16.gmra.mrb[0].mxu0 %v904
        %v943 = vpop.f32.mrb[0].mxu0
        %v944 = vadd.f32 %v563, %v943
        %v945 = vpop.f32.mrb[0].mxu0
        %v946 = vpop.f32.mrb[0].mxu0
        %v947 = vpop.f32.mrb[0].mxu0
        %948 = vdwg.mxu0
        %v949 = vsel %vm567, %v944, -inf
        %950 = vmax.xlane.f32.xlu0 %v949
        %v951 = vpop.xlane.xlu0 %950
        %v952 = vsub.f32 %v944, %v951
        %v953 = vmul.f32 %v952, 1.442695
        %v954 = vpow.pop %v953
        %v955 = vsel %vm567, %v954, 0.0
        %956 = vadd.xlane.f32.xlu0 %v955
        %v957 = vpop.xlane.xlu0 %956
        %v958 = vrcp.pop %v957
        %v959 = vmul.f32 %v954, %v958
        %v960 = vpack.c.bf16 %v959, %v959
        %961 = vrot.lane.b32.xlu0 %v562, 40
        %v962 = vpop.permute.xlu0 %961
        %v964 = vsel %vm567, %v960, 0
        %v967 = vsel %vm631, %v962, 0
        %969 = vmatprep.subr.bf16.mxu0 0
        %970 = vmatpush1.bf16.msra.mxu0 %v967
        %971 = vmatprep.subr.bf16.mxu0 0
        %972 = vmatpush1.bf16.msra.mxu0 0
        %973 = vmatprep.subr.bf16.mxu0 0
        %974 = vmatpush1.bf16.msra.mxu0 0
        %975 = vmatprep.subr.bf16.mxu0 0
        %976 = vmatpush1.bf16.msra.mxu0 0
        %977 = vmatprep.subr.bf16.mxu0 0
        %978 = vmatpush1.bf16.msra.mxu0 0
        %979 = vmatprep.subr.bf16.mxu0 0
        %980 = vmatpush1.bf16.msra.mxu0 0
        %981 = vmatprep.subr.bf16.mxu0 0
        %982 = vmatpush1.bf16.msra.mxu0 0
        %983 = vmatprep.subr.bf16.mxu0 0
        %984 = vmatpush1.bf16.msra.mxu0 0
        %985 = vmatprep.subr.bf16.mxu0 0
        %986 = vmatpush1.bf16.msra.mxu0 0
        %987 = vmatprep.subr.bf16.mxu0 0
        %988 = vmatpush1.bf16.msra.mxu0 0
        %989 = vmatprep.subr.bf16.mxu0 0
        %990 = vmatpush1.bf16.msra.mxu0 0
        %991 = vmatprep.subr.bf16.mxu0 0
        %992 = vmatpush1.bf16.msra.mxu0 0
        %993 = vmatprep.subr.bf16.mxu0 0
        %994 = vmatpush1.bf16.msra.mxu0 0
        %995 = vmatprep.subr.bf16.mxu0 0
        %996 = vmatpush1.bf16.msra.mxu0 0
        %997 = vmatprep.subr.bf16.mxu0 0
        %998 = vmatpush1.bf16.msra.mxu0 0
        %999 = vmatprep.subr.bf16.mxu0 0
        %1000 = vmatpush1.bf16.msra.mxu0 0
        %1001 = vmatprep.mubr.bf16.mxu0 0
        %1002 = vmatmul.mubr.bf16.gmra.mrb[0].mxu0 %v964
        %v1003 = vpop.f32.mrb[0].mxu0
        %v1004 = vadd.f32 0.0, %v1003
        %v1005 = vpop.f32.mrb[0].mxu0
        %v1006 = vpop.f32.mrb[0].mxu0
        %v1007 = vpop.f32.mrb[0].mxu0
        %1008 = vdwg.mxu0
        %v1009 = vpack.c.bf16 %v1004, %v1004
        %1011 = vrot.lane.b32.xlu0 %v787, 8
        %v1012 = vpop.permute.xlu0 %1011
        %1014 = vrot.lane.b32.xlu0 %v898, 16
        %v1015 = vpop.permute.xlu0 %1014
        %1017 = vrot.lane.b32.xlu0 %v1009, 24
        %v1018 = vpop.permute.xlu0 %1017
        %v1021 = vsel %vm567, %v675, %v1012
        %vm1022 = vcmask 130048
        %v1024 = vsel %vm1022, %v1021, %v1015
        %vm1025 = vcmask 195584
        %v1027 = vsel %vm1025, %v1024, %v1018
        %v1028 = vld [vmem:[%s443] sm:$0xf]
        %v1029 = vld [vmem:[%s443 + $0x4] sm:$0xf]
        %v1030 = vld [vmem:[%s443 + $0x8] sm:$0xf]
        %v1031 = vld [vmem:[%s443 + $0xc] sm:$0xf]
        %v1032 = vlaneseq
        %v1033 = vshrl.u32 %v1032, 7
        %v1034 = vsub.s32 4, %v1033
        %v1035 = vrot.slane %v467, %v1034
        %v1040 = vunpack.c.l.b16 %v1028
        %v1041 = vunpack.c.l.b16 %v1029
        %v1042 = vunpack.c.l.b16 %v1030
        %v1043 = vunpack.c.l.b16 %v1031
        %v1044 = vpack.c.b16 %v1041, %v1040
        %v1045 = vpack.c.b16 %v1043, %v1042
        %v1048 = vsel %vm469, %v1027, 0
        %1050 = vmatprep.subr.bf16.mxu0 0
        %1051 = vmatpush1.bf16.msra.mxu0 %v1044
        %1052 = vmatprep.subr.bf16.mxu0 0
        %1053 = vmatpush1.bf16.msra.mxu0 %v1045
        %1054 = vmatprep.subr.bf16.mxu0 0
        %1055 = vmatpush1.bf16.msra.mxu0 0
        %1056 = vmatprep.subr.bf16.mxu0 0
        %1057 = vmatpush1.bf16.msra.mxu0 0
        %1058 = vmatprep.subr.bf16.mxu0 0
        %1059 = vmatpush1.bf16.msra.mxu0 0
        %1060 = vmatprep.subr.bf16.mxu0 0
        %1061 = vmatpush1.bf16.msra.mxu0 0
        %1062 = vmatprep.subr.bf16.mxu0 0
        %1063 = vmatpush1.bf16.msra.mxu0 0
        %1064 = vmatprep.subr.bf16.mxu0 0
        %1065 = vmatpush1.bf16.msra.mxu0 0
        %1066 = vmatprep.subr.bf16.mxu0 0
        %1067 = vmatpush1.bf16.msra.mxu0 0
        %1068 = vmatprep.subr.bf16.mxu0 0
        %1069 = vmatpush1.bf16.msra.mxu0 0
        %1070 = vmatprep.subr.bf16.mxu0 0
        %1071 = vmatpush1.bf16.msra.mxu0 0
        %1072 = vmatprep.subr.bf16.mxu0 0
        %1073 = vmatpush1.bf16.msra.mxu0 0
        %1074 = vmatprep.subr.bf16.mxu0 0
        %1075 = vmatpush1.bf16.msra.mxu0 0
        %1076 = vmatprep.subr.bf16.mxu0 0
        %1077 = vmatpush1.bf16.msra.mxu0 0
        %1078 = vmatprep.subr.bf16.mxu0 0
        %1079 = vmatpush1.bf16.msra.mxu0 0
        %1080 = vmatprep.subr.bf16.mxu0 0
        %1081 = vmatpush1.bf16.msra.mxu0 0
        %1082 = vmatprep.mubr.bf16.mxu0 0
        %1083 = vmatmul.mubr.bf16.gmra.mrb[0].mxu0 %v1048
        %v1084 = vpop.f32.mrb[0].mxu0
        %v1085 = vadd.f32 %v1035, %v1084
        %v1086 = vpop.f32.mrb[0].mxu0
        %v1087 = vpop.f32.mrb[0].mxu0
        %v1088 = vpop.f32.mrb[0].mxu0
        %1089 = vdwg.mxu0
        %v1090 = vadd.f32 %v466, %v1085
        %v1091 = vsel %vm469, %v1090, 0.0
        %1092 = vadd.xlane.f32.xlu0 %v1091
        %v1093 = vpop.xlane.xlu0 %1092
        %v1094 = vmul.f32 %v1093, %v473
        %v1095 = vsub.f32 %v1090, %v1094
        %v1096 = vmul.f32 %v1095, %v1095
        %v1097 = vsel %vm469, %v1096, 0.0
        %1098 = vadd.xlane.f32.xlu0 %v1097
        %v1099 = vpop.xlane.xlu0 %1098
        %v1100 = vmul.f32 %v1099, %v473
        %v1101 = vadd.f32 %v1100, 1e-05
        %v1102 = vrsqrt.pop %v1101
        %v1103 = vmul.f32 %v1095, %v1102
        %v1104 = vlaneseq
        %v1105 = vshrl.u32 %v1104, 7
        %v1106 = vsub.s32 2, %v1105
        %v1107 = vrot.slane %v467, %v1106
        %v1108 = vmul.f32 %v1103, %v1107
        %v1109 = vlaneseq
        %v1110 = vshrl.u32 %v1109, 7
        %v1111 = vsub.s32 3, %v1110
        %v1112 = vrot.slane %v467, %v1111
        %v1113 = vadd.f32 %v1108, %v1112
        %v1114 = vpack.c.bf16 %v1113, %v1113
        %v1115 = vld [vmem:[%s448] sm:$0xf]
        %v1116 = vld [vmem:[%s448 + $0x4] sm:$0xf]
        %v1117 = vld [vmem:[%s448 + $0x8] sm:$0xf]
        %v1118 = vld [vmem:[%s448 + $0xc] sm:$0xf]
        %v1119 = vlaneseq
        %v1120 = vshrl.u32 %v1119, 7
        %v1121 = vsub.s32 1, %v1120
        %v1122 = vrot.slane %v468, %v1121
        %v1127 = vunpack.c.l.b16 %v1115
        %v1128 = vunpack.c.l.b16 %v1116
        %v1129 = vunpack.c.l.b16 %v1117
        %v1130 = vunpack.c.l.b16 %v1118
        %v1131 = vpack.c.b16 %v1128, %v1127
        %v1132 = vpack.c.b16 %v1130, %v1129
        %1135 = vrot.lane.b32.xlu0 %v503, 32
        %v1136 = vpop.permute.xlu0 %1135
        %1137 = vrot.lane.b32.xlu0 %v1122, 32
        %v1138 = vpop.permute.xlu0 %1137
        %v1139 = vsel %vm469, %v1136, %v1138
        %v1142 = vsel %vm469, %v1114, 0
        %1144 = vmatprep.subr.bf16.mxu0 0
        %1145 = vmatpush1.bf16.msra.mxu0 %v1131
        %1146 = vmatprep.subr.bf16.mxu0 0
        %1147 = vmatpush1.bf16.msra.mxu0 %v1132
        %1148 = vmatprep.subr.bf16.mxu0 0
        %1149 = vmatpush1.bf16.msra.mxu0 0
        %1150 = vmatprep.subr.bf16.mxu0 0
        %1151 = vmatpush1.bf16.msra.mxu0 0
        %1152 = vmatprep.subr.bf16.mxu0 0
        %1153 = vmatpush1.bf16.msra.mxu0 0
        %1154 = vmatprep.subr.bf16.mxu0 0
        %1155 = vmatpush1.bf16.msra.mxu0 0
        %1156 = vmatprep.subr.bf16.mxu0 0
        %1157 = vmatpush1.bf16.msra.mxu0 0
        %1158 = vmatprep.subr.bf16.mxu0 0
        %1159 = vmatpush1.bf16.msra.mxu0 0
        %1160 = vmatprep.subr.bf16.mxu0 0
        %1161 = vmatpush1.bf16.msra.mxu0 0
        %1162 = vmatprep.subr.bf16.mxu0 0
        %1163 = vmatpush1.bf16.msra.mxu0 0
        %1164 = vmatprep.subr.bf16.mxu0 0
        %1165 = vmatpush1.bf16.msra.mxu0 0
        %1166 = vmatprep.subr.bf16.mxu0 0
        %1167 = vmatpush1.bf16.msra.mxu0 0
        %1168 = vmatprep.subr.bf16.mxu0 0
        %1169 = vmatpush1.bf16.msra.mxu0 0
        %1170 = vmatprep.subr.bf16.mxu0 0
        %1171 = vmatpush1.bf16.msra.mxu0 0
        %1172 = vmatprep.subr.bf16.mxu0 0
        %1173 = vmatpush1.bf16.msra.mxu0 0
        %1174 = vmatprep.subr.bf16.mxu0 0
        %1175 = vmatpush1.bf16.msra.mxu0 0
        %1176 = vmatprep.mubr.bf16.mxu0 0
        %1177 = vmatmul.mubr.bf16.gmra.mrb[0].mxu0 %v1142
        %v1178 = vpop.f32.mrb[0].mxu0
        %v1179 = vadd.f32 %v1139, %v1178
        %v1180 = vpop.f32.mrb[0].mxu0
        %v1181 = vpop.f32.mrb[0].mxu0
        %v1182 = vpop.f32.mrb[0].mxu0
        %1183 = vdwg.mxu0
        %v1184 = vpack.c.bf16 %v1179, %v1179
        %v1185 = vmul.bf16 %v1184, %v1184
        %v1186 = vmul.bf16 %v1184, %v1185
        %v1187 = vmul.bf16 %v1186, 1027030327
        %v1188 = vadd.bf16 %v1184, %v1187
        %v1189 = vmul.bf16 %v1188, 1061961548
        %v1190 = vtanh.bf16.pop %v1189
        %v1191 = vadd.bf16 %v1190, 1065369472
        %v1192 = vmul.bf16 %v1191, 1056980736
        %v1193 = vmul.bf16 %v1184, %v1192
        %v1194 = vld [vmem:[%s453] sm:$0xf]
        %v1195 = vld [vmem:[%s453 + $0x4] sm:$0xf]
        %v1196 = vld [vmem:[%s453 + $0x8] sm:$0xf]
        %v1197 = vld [vmem:[%s453 + $0xc] sm:$0xf]
        %v1198 = vld [vmem:[%s453 + $0x10] sm:$0xf]
        %v1199 = vld [vmem:[%s453 + $0x14] sm:$0xf]
        %v1200 = vld [vmem:[%s453 + $0x18] sm:$0xf]
        %v1201 = vld [vmem:[%s453 + $0x1c] sm:$0xf]
        %v1202 = vld [vmem:[%s453 + $0x20] sm:$0xf]
        %v1203 = vld [vmem:[%s453 + $0x24] sm:$0xf]
        %v1204 = vld [vmem:[%s453 + $0x28] sm:$0xf]
        %v1205 = vld [vmem:[%s453 + $0x2c] sm:$0xf]
        %v1206 = vld [vmem:[%s453 + $0x30] sm:$0xf]
        %v1207 = vld [vmem:[%s453 + $0x34] sm:$0xf]
        %v1208 = vld [vmem:[%s453 + $0x38] sm:$0xf]
        %v1209 = vld [vmem:[%s453 + $0x3c] sm:$0xf]
        %v1210 = vlaneseq
        %v1211 = vshrl.u32 %v1210, 7
        %v1212 = vsub.s32 5, %v1211
        %v1213 = vrot.slane %v467, %v1212
        %v1230 = vunpack.c.l.b16 %v1194
        %v1231 = vunpack.c.l.b16 %v1195
        %v1232 = vunpack.c.l.b16 %v1196
        %v1233 = vunpack.c.l.b16 %v1197
        %v1234 = vunpack.c.l.b16 %v1198
        %v1235 = vunpack.c.l.b16 %v1199
        %v1236 = vunpack.c.l.b16 %v1200
        %v1237 = vunpack.c.l.b16 %v1201
        %v1238 = vunpack.c.l.b16 %v1202
        %v1239 = vunpack.c.l.b16 %v1203
        %v1240 = vunpack.c.l.b16 %v1204
        %v1241 = vunpack.c.l.b16 %v1205
        %v1242 = vunpack.c.l.b16 %v1206
        %v1243 = vunpack.c.l.b16 %v1207
        %v1244 = vunpack.c.l.b16 %v1208
        %v1245 = vunpack.c.l.b16 %v1209
        %v1246 = vpack.c.b16 %v1231, %v1230
        %v1247 = vpack.c.b16 %v1233, %v1232
        %v1248 = vpack.c.b16 %v1235, %v1234
        %v1249 = vpack.c.b16 %v1237, %v1236
        %v1250 = vpack.c.b16 %v1239, %v1238
        %v1251 = vpack.c.b16 %v1241, %v1240
        %v1252 = vpack.c.b16 %v1243, %v1242
        %v1253 = vpack.c.b16 %v1245, %v1244
        %1262 = vmatprep.subr.bf16.mxu0 0
        %1263 = vmatpush1.bf16.msra.mxu0 %v1246
        %1264 = vmatprep.subr.bf16.mxu0 0
        %1265 = vmatpush1.bf16.msra.mxu0 %v1247
        %1266 = vmatprep.subr.bf16.mxu0 0
        %1267 = vmatpush1.bf16.msra.mxu0 %v1248
        %1268 = vmatprep.subr.bf16.mxu0 0
        %1269 = vmatpush1.bf16.msra.mxu0 %v1249
        %1270 = vmatprep.subr.bf16.mxu0 0
        %1271 = vmatpush1.bf16.msra.mxu0 %v1250
        %1272 = vmatprep.subr.bf16.mxu0 0
        %1273 = vmatpush1.bf16.msra.mxu0 %v1251
        %1274 = vmatprep.subr.bf16.mxu0 0
        %1275 = vmatpush1.bf16.msra.mxu0 %v1252
        %1276 = vmatprep.subr.bf16.mxu0 0
        %1277 = vmatpush1.bf16.msra.mxu0 %v1253
        %1278 = vmatprep.subr.bf16.mxu0 0
        %1279 = vmatpush1.bf16.msra.mxu0 0
        %1280 = vmatprep.subr.bf16.mxu0 0
        %1281 = vmatpush1.bf16.msra.mxu0 0
        %1282 = vmatprep.subr.bf16.mxu0 0
        %1283 = vmatpush1.bf16.msra.mxu0 0
        %1284 = vmatprep.subr.bf16.mxu0 0
        %1285 = vmatpush1.bf16.msra.mxu0 0
        %1286 = vmatprep.subr.bf16.mxu0 0
        %1287 = vmatpush1.bf16.msra.mxu0 0
        %1288 = vmatprep.subr.bf16.mxu0 0
        %1289 = vmatpush1.bf16.msra.mxu0 0
        %1290 = vmatprep.subr.bf16.mxu0 0
        %1291 = vmatpush1.bf16.msra.mxu0 0
        %1292 = vmatprep.subr.bf16.mxu0 0
        %1293 = vmatpush1.bf16.msra.mxu0 0
        %1294 = vmatprep.mubr.bf16.mxu0 0
        %1295 = vmatmul.mubr.bf16.gmra.mrb[0].mxu0 %v1193
        %v1296 = vpop.f32.mrb[0].mxu0
        %v1297 = vadd.f32 %v1213, %v1296
        %v1298 = vpop.f32.mrb[0].mxu0
        %v1299 = vpop.f32.mrb[0].mxu0
        %v1300 = vpop.f32.mrb[0].mxu0
        %1301 = vdwg.mxu0
        %v1302 = vadd.f32 %v1090, %v1297
        %p1303 = scmp.lt.s32.totalorder %s28, 1
        // Predicated region
        $region61: #{tpu_custom_call.1} parent=55 // pred_check
          %p1304 = pneg %p1303
        $region62: #{tpu_custom_call.1} parent=55 // pred_check_branch
          %1306 = sbr.rel (%p1304) target = $region64
        $region63: #{tpu_custom_call.1} parent=55 // pred_region
          %1307 = vst.msk [vmem:[%s421] sm:$0xff] %vm469, %v1302
        $region64: #{tpu_custom_call.1} parent=55 // pred_fallthru
          _
        %p1308 = scmp.eq.s32.totalorder %s28, 1
        // Predicated region
        $region65: #{tpu_custom_call.1} parent=55 // pred_check
          %p1309 = pneg %p1308
        $region66: #{tpu_custom_call.1} parent=55 // pred_check_branch
          %1311 = sbr.rel (%p1309) target = $region68
        $region67: #{tpu_custom_call.1} parent=55 // pred_region
          %v1312 = vld [vmem:[%s8] sm:$0xff]
          %v1313 = vsel %vm469, %v1302, 0.0
          %1314 = vadd.xlane.f32.xlu0 %v1313
          %v1315 = vpop.xlane.xlu0 %1314
          %v1316 = vmul.f32 %v1315, %v473
          %v1317 = vsub.f32 %v1302, %v1316
          %v1318 = vmul.f32 %v1317, %v1317
          %v1319 = vsel %vm469, %v1318, 0.0
          %1320 = vadd.xlane.f32.xlu0 %v1319
          %v1321 = vpop.xlane.xlu0 %1320
          %v1322 = vmul.f32 %v1321, %v473
          %v1323 = vadd.f32 %v1322, 1e-05
          %v1324 = vrsqrt.pop %v1323
          %v1325 = vmul.f32 %v1317, %v1324
          %v1326 = vlaneseq
          %v1327 = vshrl.u32 %v1326, 7
          %v1328 = vsub.s32 0, %v1327
          %v1329 = vrot.slane %v1312, %v1328
          %v1330 = vmul.f32 %v1325, %v1329
          %v1331 = vlaneseq
          %v1332 = vshrl.u32 %v1331, 7
          %v1333 = vsub.s32 1, %v1332
          %v1334 = vrot.slane %v1312, %v1333
          %v1335 = vadd.f32 %v1330, %v1334
          %1336 = vst.msk [vmem:[%s421] sm:$0xff] %vm469, %v1335
        $region68: #{tpu_custom_call.1} parent=55 // pred_fallthru
          _
        %s1337 = sand.u32 %s267, 1
        %s1338 = scalar_lea.sflag [#allocation3], %s1337
        %s1339 = sand.u32 %s267, 1
        %s1340 = smul.addr %s1339, 8
        %s1341 = scalar_lea.vmem [#allocation2], %s1340
        // Predicated region
        $region69: #{tpu_custom_call.1} parent=55 // pred_check
          %p1342 = pneg %p277
        $region70: #{tpu_custom_call.1} parent=55 // pred_check_branch
          %1344 = sbr.rel (%p1342) target = $region72
        $region71: #{tpu_custom_call.1} parent=55 // pred_region
          %s1346 = ssub.s32 128, 128
          %1347 = vsyncadd %s1338, %s1346
          %s1348 = smul.addr %s27, 128
          %s1349 = scalar_lea.hbm %s9, %s1348
          %s1351 = sshll.u32 %s1341, 4
          %s1352 = int_to_ptr.vmem [resolvable:$true] %s1351
          %1354 = dma.vmem_to_hbm [thread:$0]  %s1352, 128, %s1349, %s1338
        $region72: #{tpu_custom_call.1} parent=55 // pred_fallthru
          _
      $region56: #{tpu_custom_call.1} parent=5 // pred_fallthru
        _
      %p1355 = scmp.le.s32.totalorder 2, %s18
      // Predicated region
      $region73: #{tpu_custom_call.1} parent=5 // pred_check
        %p1356 = pneg %p1355
      $region74: #{tpu_custom_call.1} parent=5 // pred_check_branch
        %1358 = sbr.rel (%p1356) target = $region76
      $region75: #{tpu_custom_call.1} parent=5 // pred_region
        %s1359 = ssub.s32 %s18, 2
        // Predicated region
        $region77: #{tpu_custom_call.1} parent=75 // pred_check
          %p1360 = pneg %p283
        $region78: #{tpu_custom_call.1} parent=75 // pred_check_branch
          %1362 = sbr.rel (%p1360) target = $region80
        $region79: #{tpu_custom_call.1} parent=75 // pred_region
          %s1363 = sand.u32 %s268, 1
          %s1364 = scalar_lea.sflag [#allocation3], %s1363
          %s1365 = sand.u32 %s268, 1
          %s1366 = smul.addr %s1365, 8
          %s1367 = scalar_lea.vmem [#allocation2], %s1366
          %1368 = dma.done %s1364, 128
        $region80: #{tpu_custom_call.1} parent=75 // pred_fallthru
          _
      $region76: #{tpu_custom_call.1} parent=5 // pred_fallthru
        _
    $region6: #{tpu_custom_call.1} parent=1 // loop_footer
      %s22 = sadd.s32 1, %s18
    $region7: #{tpu_custom_call.1} parent=1 // loop_footer_branch
      %17 = sbr.rel target = $region3
    $region8: #{tpu_custom_call.1} parent=1 // loop_exit
      _
    %1369 = vsyncpa [#allocation3], 1
    %s1370 = scalar_lea.sflag [#allocation3], 1
    %1371 = vsyncpa %s1370, 1

</llo_original>
